<compile_context>
chip_gen: v7x
topology: tpu7x:2x2x1
jax: 0.10.0
libtpu: 0.0.40
codegen_flags: <defaults>
</compile_context>

<pallas_src>
import functools

import jax
import jax.numpy as jnp
from jax.experimental import pallas as pl
from jax.experimental.pallas import tpu as pltpu

LRELU_SLOPE = 0.01
BN_EPS = 1e-5
LANE = 128
TILE_M_MAX = 512                 # rows per M tile (multiple of 8)
VMEM_LIMIT = 32 * 1024 * 1024    # safe on v5e/v6e/v7x


def _round_up(x, n):
    return ((x + n - 1) // n) * n


# ----------------------------- Pallas kernels ------------------------------

def _phase_matmul_bias_kernel(a_ref, w_ref, b_ref, o_ref):
    # a: (1, TM, K) bf16   w: (1, K, Cp) bf16   b: (1, Cp) f32   o: (1, TM, Cp) f32
    acc = jnp.dot(a_ref[0], w_ref[0], preferred_element_type=jnp.float32)
    o_ref[0] = acc + b_ref[...]


def _matmul_bias_stats_kernel(m_valid, tile_m, a_ref, w_ref, b_ref,
                              y_ref, stats_ref):
    # Tiled conv matmul + bias; also emits per-tile partial (sum, sumsq) so the
    # BatchNorm statistics stay global across all M tiles.
    i = pl.program_id(0)
    y = jnp.dot(a_ref[...], w_ref[...], preferred_element_type=jnp.float32)
    y = y + b_ref[...]
    y_ref[...] = y
    row = i * tile_m + jax.lax.broadcasted_iota(jnp.int32, (tile_m, 1), 0)
    ym = jnp.where(row < m_valid, y, 0.0)          # mask padded rows
    s1 = jnp.sum(ym, axis=0, keepdims=True)        # (1, Cp)
    s2 = jnp.sum(ym * ym, axis=0, keepdims=True)   # (1, Cp)
    stats_ref[0] = jnp.concatenate([s1, s2], axis=0)


def _bn_lrelu_kernel(y_ref, scale_ref, shift_ref, o_ref):
    # y: (TM, Cp) f32 ; scale/shift: (1, Cp) f32  (all elementwise math in f32)
    z = y_ref[...] * scale_ref[...] + shift_ref[...]
    o_ref[...] = jnp.where(z >= 0, z, LRELU_SLOPE * z)


# ------------------------------- JAX glue ----------------------------------

def _im2col_multi(inputs, k, pad):
    """k x k patches (stride 1) over channel-concatenated inputs.

    Fuses torch.cat([...], dim=1): per tap, channels are appended in the order
    of `inputs`, matching the conv weight's cin ordering. Returns
    (N*OH*OW, k*k*sum(Cin)) and (N, OH, OW).
    """
    n, h, w = inputs[0].shape[:3]
    padded = [jnp.pad(t, ((0, 0), (pad, pad), (pad, pad), (0, 0)))
              for t in inputs]
    oh = h + 2 * pad - k + 1
    ow = w + 2 * pad - k + 1
    cols = []
    for kh in range(k):
        for kw in range(k):
            for t in padded:
                cols.append(t[:, kh:kh + oh, kw:kw + ow, :])
    patches = jnp.concatenate(cols, axis=-1)
    return patches.reshape(n * oh * ow, patches.shape[-1]), (n, oh, ow)


def conv_transpose2d_phase(x_nhwc, w_phase_bf16, b_pad, cout):
    """ConvTranspose2d(k=4, s=2, p=1) via 2x2 phase decomposition.

    w_phase_bf16: (4, 4*Cin, Cp) bf16 precomputed; b_pad: (1, Cp) f32.
    """
    n, h, w, cin = x_nhwc.shape
    xp = jnp.pad(x_nhwc, ((0, 0), (1, 1), (1, 1), (0, 0)))
    m = n * h * w
    k_dim = 4 * cin

    # Per-phase 2x2 patch matrices (phase p = 2*r + s).
    phases = []
    for r in (0, 1):
        for s in (0, 1):
            taps = []
            for dh in (0, 1):
                for dw in (0, 1):
                    taps.append(xp[:, r + dh:r + dh + h, s + dw:s + dw + w, :])
            phases.append(jnp.concatenate(taps, axis=-1).reshape(m, k_dim))
    a = jnp.stack(phases, axis=0)                          # (4, M, 4*Cin)

    tile_m = min(TILE_M_MAX, _round_up(m, 8))
    mp = _round_up(m, tile_m)
    a = jnp.pad(a, ((0, 0), (0, mp - m), (0, 0))).astype(jnp.bfloat16)
    cp = w_phase_bf16.shape[-1]

    y = pl.pallas_call(
        _phase_matmul_bias_kernel,
        grid=(4, mp // tile_m),
        in_specs=[
            pl.BlockSpec((1, tile_m, k_dim), lambda p, mm: (p, mm, 0)),
            pl.BlockSpec((1, k_dim, cp), lambda p, mm: (p, 0, 0)),
            pl.BlockSpec((1, cp), lambda p, mm: (0, 0)),
        ],
        out_specs=pl.BlockSpec((1, tile_m, cp), lambda p, mm: (p, mm, 0)),
        out_shape=jax.ShapeDtypeStruct((4, mp, cp), jnp.float32),
        compiler_params=pltpu.CompilerParams(
            dimension_semantics=("parallel", "parallel"),
            vmem_limit_bytes=VMEM_LIMIT),
    )(a, w_phase_bf16, b_pad)

    y = y[:, :m, :cout]                                    # (4, M, Cout)
    y = y.reshape(2, 2, n, h, w, cout)                     # (r, s, N, H, W, C)
    y = jnp.transpose(y, (2, 3, 0, 4, 1, 5)).reshape(n, 2 * h, 2 * w, cout)
    return y


def conv2d_bn_lrelu(inputs, w_mat_bf16, b_pad, gamma_pad, beta_pad, cout,
                    k=3, pad=1):
    """Conv2d(k, padding=pad) + BatchNorm2d(train) + LeakyReLU, M-tiled."""
    patches, (n, oh, ow) = _im2col_multi(inputs, k, pad)
    m, k_dim = patches.shape
    cp = w_mat_bf16.shape[-1]

    tile_m = min(TILE_M_MAX, _round_up(m, 8))
    mp = _round_up(m, tile_m)
    num_tiles = mp // tile_m
    a = jnp.pad(patches, ((0, mp - m), (0, 0))).astype(jnp.bfloat16)

    kernel = functools.partial(_matmul_bias_stats_kernel, m, tile_m)
    y, partials = pl.pallas_call(
        kernel,
        grid=(num_tiles,),
        in_specs=[
            pl.BlockSpec((tile_m, k_dim), lambda i: (i, 0)),
            pl.BlockSpec((k_dim, cp), lambda i: (0, 0)),   # resident weights
            pl.BlockSpec((1, cp), lambda i: (0, 0)),
        ],
        out_specs=(
            pl.BlockSpec((tile_m, cp), lambda i: (i, 0)),
            pl.BlockSpec((1, 2, cp), lambda i: (i, 0, 0)),
        ),
        out_shape=(
            jax.ShapeDtypeStruct((mp, cp), jnp.float32),
            jax.ShapeDtypeStruct((num_tiles, 2, cp), jnp.float32),
        ),
        compiler_params=pltpu.CompilerParams(
            dimension_semantics=("parallel",),
            vmem_limit_bytes=VMEM_LIMIT),
    )(a, w_mat_bf16, b_pad)

    # --- BN statistics finalize (tiny per-channel vectors, plain JAX) ---
    stats = jnp.sum(partials, axis=0)                      # (2, Cp)
    mean = stats[0] / m
    var = jnp.maximum(stats[1] / m - mean * mean, 0.0)     # biased variance
    scale = gamma_pad * jax.lax.rsqrt(var + BN_EPS)
    shift = beta_pad - mean * scale
    scale = scale.reshape(1, cp)
    shift = shift.reshape(1, cp)

    out = pl.pallas_call(
        _bn_lrelu_kernel,
        grid=(num_tiles,),
        in_specs=[
            pl.BlockSpec((tile_m, cp), lambda i: (i, 0)),
            pl.BlockSpec((1, cp), lambda i: (0, 0)),
            pl.BlockSpec((1, cp), lambda i: (0, 0)),
        ],
        out_specs=pl.BlockSpec((tile_m, cp), lambda i: (i, 0)),
        out_shape=jax.ShapeDtypeStruct((mp, cp), jnp.float32),
        compiler_params=pltpu.CompilerParams(
            dimension_semantics=("parallel",),
            vmem_limit_bytes=VMEM_LIMIT),
    )(y, scale, shift)

    return out[:m, :cout].reshape(n, oh, ow, cout)


# --------------------------- parameter preparation --------------------------

def _prep_up_weight(wt, cp):
    """(Cin, Cout, 4, 4) ConvTranspose2d weight -> (4, 4*Cin, Cp) bf16 phase slices."""
    cin, cout = wt.shape[0], wt.shape[1]
    w_phases = []
    for r in (0, 1):
        for s in (0, 1):
            taps = []
            for dh in (0, 1):
                for dw in (0, 1):
                    kh = 3 - 2 * dh if r == 0 else 2 - 2 * dh
                    kw = 3 - 2 * dw if s == 0 else 2 - 2 * dw
                    taps.append(wt[:, :, kh, kw])          # (Cin, Cout)
            w_phases.append(jnp.stack(taps, axis=0).reshape(4 * cin, cout))
    w_all = jnp.stack(w_phases, axis=0)                    # (4, 4*Cin, Cout)
    w_all = jnp.pad(w_all, ((0, 0), (0, 0), (0, cp - cout)))
    return w_all.astype(jnp.bfloat16)


def _prep_conv_weight(wconv, cp):
    """(Cout, Cin, k, k) Conv2d weight -> (k*k*Cin, Cp) bf16, rows = (kh, kw, cin)."""
    cout, cin, k, _ = wconv.shape
    w_mat = jnp.transpose(wconv, (2, 3, 1, 0)).reshape(k * k * cin, cout)
    w_mat = jnp.pad(w_mat, ((0, 0), (0, cp - cout)))
    return w_mat.astype(jnp.bfloat16)


def prepare_params(p, dim_x, out_dim):
    """Hoist all weight relayout / padding / bf16 casts out of the forward path."""
    cp_up = _round_up(dim_x, LANE)
    cp_out = _round_up(out_dim, LANE)
    return dict(
        up_w=_prep_up_weight(p["up_w"], cp_up),
        up_b=jnp.pad(p["up_b"], (0, cp_up - dim_x)).reshape(1, cp_up),
        c1_w=_prep_conv_weight(p["c1_w"], cp_out),
        c1_b=jnp.pad(p["c1_b"], (0, cp_out - out_dim)).reshape(1, cp_out),
        bn1_g=jnp.pad(p["bn1_g"], (0, cp_out - out_dim)),
        bn1_b=jnp.pad(p["bn1_b"], (0, cp_out - out_dim)),
        c2_w=_prep_conv_weight(p["c2_w"], cp_out),
        c2_b=jnp.pad(p["c2_b"], (0, cp_out - out_dim)).reshape(1, cp_out),
        bn2_g=jnp.pad(p["bn2_g"], (0, cp_out - out_dim)),
        bn2_b=jnp.pad(p["bn2_b"], (0, cp_out - out_dim)),
    )


# ------------------------------ forward pass --------------------------------

@functools.partial(jax.jit, static_argnames=("out_dim",))
def upstream_block_2d_forward(params, x_nchw, y_nchw, *, out_dim):
    """Forward pass of upstream_block_2d. Public interface is NCHW (PyTorch)."""
    x = jnp.transpose(x_nchw, (0, 2, 3, 1))                # -> NHWC
    ya = jnp.transpose(y_nchw, (0, 2, 3, 1))
    dim_x = x.shape[-1]

    xu = conv_transpose2d_phase(x, params["up_w"], params["up_b"], dim_x)
    # torch.cat([x, y], 1) is fused into the first conv's patch assembly.
    h = conv2d_bn_lrelu([xu, ya], params["c1_w"], params["c1_b"],
                        params["bn1_g"], params["bn1_b"], out_dim)
    h = conv2d_bn_lrelu([h], params["c2_w"], params["c2_b"],
                        params["bn2_g"], params["bn2_b"], out_dim)
    return jnp.transpose(h, (0, 3, 1, 2))                  # -> NCHW


# --------------------------- raw parameter creation --------------------------

def init_params(key, dim_x, dim_y, out_dim, kernel_dim=3):
    keys = jax.random.split(key, 6)
    s = 0.1
    return dict(
        up_w=s * jax.random.normal(keys[0], (dim_x, dim_x, 4, 4), jnp.float32),
        up_b=s * jax.random.normal(keys[1], (dim_x,), jnp.float32),
        c1_w=s * jax.random.normal(
            keys[2], (out_dim, dim_x + dim_y, kernel_dim, kernel_dim),
            jnp.float32),
        c1_b=s * jax.random.normal(keys[3], (out_dim,), jnp.float32),
        bn1_g=jnp.ones((out_dim,), jnp.float32),
        bn1_b=jnp.zeros((out_dim,), jnp.float32),
        c2_w=s * jax.random.normal(
            keys[4], (out_dim, out_dim, kernel_dim, kernel_dim), jnp.float32),
        c2_b=s * jax.random.normal(keys[5], (out_dim,), jnp.float32),
        bn2_g=jnp.ones((out_dim,), jnp.float32),
        bn2_b=jnp.zeros((out_dim,), jnp.float32),
    )


if __name__ == "__main__":
    dim_x, dim_y, out_dim = 4, 4, 8
    N, H, W = 2, 8, 8

    key = jax.random.PRNGKey(0)
    kx, ky, kp = jax.random.split(key, 3)
    raw = init_params(kp, dim_x, dim_y, out_dim)
    params = prepare_params(raw, dim_x, out_dim)            # hoisted relayout

    x = jax.random.normal(kx, (N, dim_x, H, W), jnp.float32)           # NCHW
    y = jax.random.normal(ky, (N, dim_y, 2 * H, 2 * W), jnp.float32)   # NCHW

    out = upstream_block_2d_forward(params, x, y, out_dim=out_dim)
    out = jax.block_until_ready(out)
    assert out.shape == (N, out_dim, 2 * H, 2 * W), out.shape
    print("KERNEL_OK")
</pallas_src>

<mosaic_0001>
module attributes {stable_mosaic.version = 11 : i64} {
  func.func @_phase_matmul_bias_kernel(%arg0: i32, %arg1: i32, %arg2: memref<1x128x16xbf16, #tpu.memory_space<vmem>>, %arg3: memref<1x16x128xbf16, #tpu.memory_space<vmem>>, %arg4: memref<1x128xf32, #tpu.memory_space<vmem>>, %arg5: memref<1x128x128xf32, #tpu.memory_space<vmem>>) attributes {dimension_semantics = [#tpu.dimension_semantics<parallel>, #tpu.dimension_semantics<parallel>], iteration_bounds = array<i64: 4, 1>, scalar_prefetch = 0 : i64, scratch_operands = 0 : i64, tpu.core_type = #tpu.core_type<tc>, window_params = [{transform_indices = @transform_0, window_bounds = array<i64: 1, 128, 16>}, {transform_indices = @transform_1, window_bounds = array<i64: 1, 16, 128>}, {pipeline_mode = #tpu.pipeline_mode<synchronous>, transform_indices = @transform_2, window_bounds = array<i64: 1, 128>}, {transform_indices = @transform_3, window_bounds = array<i64: 1, 128, 128>}]} {
    %c0 = arith.constant 0 : index
    %c0_0 = arith.constant 0 : index
    %c0_1 = arith.constant 0 : index
    %0 = vector.load %arg2[%c0, %c0_0, %c0_1] : memref<1x128x16xbf16, #tpu.memory_space<vmem>>, vector<1x128x16xbf16>
    %1 = vector.shape_cast %0 : vector<1x128x16xbf16> to vector<128x16xbf16>
    %c0_2 = arith.constant 0 : index
    %c0_3 = arith.constant 0 : index
    %c0_4 = arith.constant 0 : index
    %2 = vector.load %arg3[%c0_2, %c0_3, %c0_4] : memref<1x16x128xbf16, #tpu.memory_space<vmem>>, vector<1x16x128xbf16>
    %3 = vector.shape_cast %2 : vector<1x16x128xbf16> to vector<16x128xbf16>
    %cst = arith.constant dense<0.000000e+00> : vector<128x128xf32>
    %4 = tpu.matmul %1, %3, %cst {dimension_numbers = #tpu.dot_dimension_numbers<[1], [0], [0], [1], [0, 0, 1, 1], [], []>} : vector<128x16xbf16>, vector<16x128xbf16>, vector<128x128xf32> -> vector<128x128xf32>
    %c0_5 = arith.constant 0 : index
    %c0_6 = arith.constant 0 : index
    %5 = vector.load %arg4[%c0_5, %c0_6] : memref<1x128xf32, #tpu.memory_space<vmem>>, vector<1x128xf32>
    %6 = vector.broadcast %5 : vector<1x128xf32> to vector<128x128xf32>
    %7 = arith.addf %4, %6 : vector<128x128xf32>
    %c0_7 = arith.constant 0 : index
    %c0_8 = arith.constant 0 : index
    %c0_9 = arith.constant 0 : index
    %8 = vector.load %arg5[%c0_7, %c0_8, %c0_9] : memref<1x128x128xf32, #tpu.memory_space<vmem>>, vector<1x128x128xf32>
    %9 = vector.shape_cast %8 : vector<1x128x128xf32> to vector<128x128xf32>
    %10 = vector.shape_cast %7 : vector<128x128xf32> to vector<1x128x128xf32>
    tpu.vector_store %arg5[%c0_7, %c0_8, %c0_9], %10 {strides = array<i32>} : memref<1x128x128xf32, #tpu.memory_space<vmem>>, vector<1x128x128xf32>,
    return
  }
  func.func @transform_0(%arg0: i32, %arg1: i32) -> (i32, i32, i32) {
    %c0_i32 = arith.constant 0 : i32
    %c0_i32_0 = arith.constant 0 : i32
    return %arg0, %arg1, %c0_i32 : i32, i32, i32
  }
  func.func @transform_1(%arg0: i32, %arg1: i32) -> (i32, i32, i32) {
    %c0_i32 = arith.constant 0 : i32
    %c0_i32_0 = arith.constant 0 : i32
    %c0_i32_1 = arith.constant 0 : i32
    return %arg0, %c0_i32, %c0_i32_0 : i32, i32, i32
  }
  func.func @transform_2(%arg0: i32, %arg1: i32) -> (i32, i32) {
    %c0_i32 = arith.constant 0 : i32
    %c0_i32_0 = arith.constant 0 : i32
    %c0_i32_1 = arith.constant 0 : i32
    return %c0_i32, %c0_i32_0 : i32, i32
  }
  func.func @transform_3(%arg0: i32, %arg1: i32) -> (i32, i32, i32) {
    %c0_i32 = arith.constant 0 : i32
    %c0_i32_0 = arith.constant 0 : i32
    return %arg0, %arg1, %c0_i32 : i32, i32, i32
  }
}

module attributes {stable_mosaic.version = 11 : i64} {
  func.func @_matmul_bias_stats_kernel(%arg0: i32, %arg1: memref<512x72xbf16, #tpu.memory_space<vmem>>, %arg2: memref<72x128xbf16, #tpu.memory_space<vmem>>, %arg3: memref<1x128xf32, #tpu.memory_space<vmem>>, %arg4: memref<512x128xf32, #tpu.memory_space<vmem>>, %arg5: memref<1x2x128xf32, #tpu.memory_space<vmem>>) attributes {dimension_semantics = [#tpu.dimension_semantics<parallel>], iteration_bounds = array<i64: 1>, scalar_prefetch = 0 : i64, scratch_operands = 0 : i64, tpu.core_type = #tpu.core_type<tc>, window_params = [{transform_indices = @transform_0, window_bounds = array<i64: 512, 72>}, {pipeline_mode = #tpu.pipeline_mode<synchronous>, transform_indices = @transform_1, window_bounds = array<i64: 72, 128>}, {pipeline_mode = #tpu.pipeline_mode<synchronous>, transform_indices = @transform_2, window_bounds = array<i64: 1, 128>}, {transform_indices = @transform_3, window_bounds = array<i64: 512, 128>}, {transform_indices = @transform_4, window_bounds = array<i64: 1, 2, 128>}]} {
    %c0 = arith.constant 0 : index
    %c0_0 = arith.constant 0 : index
    %0 = vector.load %arg1[%c0, %c0_0] : memref<512x72xbf16, #tpu.memory_space<vmem>>, vector<512x72xbf16>
    %c0_1 = arith.constant 0 : index
    %c0_2 = arith.constant 0 : index
    %1 = vector.load %arg2[%c0_1, %c0_2] : memref<72x128xbf16, #tpu.memory_space<vmem>>, vector<72x128xbf16>
    %cst = arith.constant dense<0.000000e+00> : vector<512x128xf32>
    %2 = tpu.matmul %0, %1, %cst {dimension_numbers = #tpu.dot_dimension_numbers<[1], [0], [0], [1], [0, 0, 1, 1], [], []>} : vector<512x72xbf16>, vector<72x128xbf16>, vector<512x128xf32> -> vector<512x128xf32>
    %c0_3 = arith.constant 0 : index
    %c0_4 = arith.constant 0 : index
    %3 = vector.load %arg3[%c0_3, %c0_4] : memref<1x128xf32, #tpu.memory_space<vmem>>, vector<1x128xf32>
    %4 = vector.broadcast %3 : vector<1x128xf32> to vector<512x128xf32>
    %5 = arith.addf %2, %4 : vector<512x128xf32>
    %c0_5 = arith.constant 0 : index
    %c0_6 = arith.constant 0 : index
    %6 = vector.load %arg4[%c0_5, %c0_6] : memref<512x128xf32, #tpu.memory_space<vmem>>, vector<512x128xf32>
    tpu.vector_store %arg4[%c0_5, %c0_6], %5 {strides = array<i32>} : memref<512x128xf32, #tpu.memory_space<vmem>>, vector<512x128xf32>,
    %c512_i32 = arith.constant 512 : i32
    %7 = arith.muli %arg0, %c512_i32 : i32
    %8 = tpu.iota {dimensions = array<i32: 0>} : vector<512x1xi32>
    %9 = vector.broadcast %7 : i32 to vector<512x1xi32>
    %10 = arith.addi %9, %8 : vector<512x1xi32>
    %c512_i32_7 = arith.constant 512 : i32
    %11 = vector.broadcast %c512_i32_7 : i32 to vector<512x1xi32>
    %12 = arith.cmpi slt, %10, %11 : vector<512x1xi32>
    %cst_8 = arith.constant 0.000000e+00 : f32
    %13 = vector.shape_cast %12 : vector<512x1xi1> to vector<512x1xi1>
    %14 = vector.broadcast %13 : vector<512x1xi1> to vector<512x128xi1>
    %15 = vector.broadcast %cst_8 : f32 to vector<512x128xf32>
    %16 = arith.select %14, %5, %15 : vector<512x128xi1>, vector<512x128xf32>
    %cst_9 = arith.constant dense<0.000000e+00> : vector<128xf32>
    %17 = vector.multi_reduction <add>, %16, %cst_9 [0] : vector<512x128xf32> to vector<128xf32>
    %18 = vector.shape_cast %17 : vector<128xf32> to vector<1x128xf32>
    %19 = arith.mulf %16, %16 : vector<512x128xf32>
    %cst_10 = arith.constant dense<0.000000e+00> : vector<128xf32>
    %20 = vector.multi_reduction <add>, %19, %cst_10 [0] : vector<512x128xf32> to vector<128xf32>
    %21 = vector.shape_cast %20 : vector<128xf32> to vector<1x128xf32>
    %22 = tpu.concatenate %18, %21 in 0 : vector<1x128xf32>, vector<1x128xf32> -> vector<2x128xf32>
    %c0_11 = arith.constant 0 : index
    %c0_12 = arith.constant 0 : index
    %c0_13 = arith.constant 0 : index
    %23 = vector.load %arg5[%c0_11, %c0_12, %c0_13] : memref<1x2x128xf32, #tpu.memory_space<vmem>>, vector<1x2x128xf32>
    %24 = vector.shape_cast %23 : vector<1x2x128xf32> to vector<2x128xf32>
    %25 = vector.shape_cast %22 : vector<2x128xf32> to vector<1x2x128xf32>
    tpu.vector_store %arg5[%c0_11, %c0_12, %c0_13], %25 {strides = array<i32>} : memref<1x2x128xf32, #tpu.memory_space<vmem>>, vector<1x2x128xf32>,
    return
  }
  func.func @transform_0(%arg0: i32) -> (i32, i32) {
    %c0_i32 = arith.constant 0 : i32
    %c0_i32_0 = arith.constant 0 : i32
    return %arg0, %c0_i32 : i32, i32
  }
  func.func @transform_1(%arg0: i32) -> (i32, i32) {
    %c0_i32 = arith.constant 0 : i32
    %c0_i32_0 = arith.constant 0 : i32
    %c0_i32_1 = arith.constant 0 : i32
    return %c0_i32, %c0_i32_0 : i32, i32
  }
  func.func @transform_2(%arg0: i32) -> (i32, i32) {
    %c0_i32 = arith.constant 0 : i32
    %c0_i32_0 = arith.constant 0 : i32
    %c0_i32_1 = arith.constant 0 : i32
    return %c0_i32, %c0_i32_0 : i32, i32
  }
  func.func @transform_3(%arg0: i32) -> (i32, i32) {
    %c0_i32 = arith.constant 0 : i32
    %c0_i32_0 = arith.constant 0 : i32
    return %arg0, %c0_i32 : i32, i32
  }
  func.func @transform_4(%arg0: i32) -> (i32, i32, i32) {
    %c0_i32 = arith.constant 0 : i32
    %c0_i32_0 = arith.constant 0 : i32
    %c0_i32_1 = arith.constant 0 : i32
    return %arg0, %c0_i32, %c0_i32_0 : i32, i32, i32
  }
}

module attributes {stable_mosaic.version = 11 : i64} {
  func.func @_bn_lrelu_kernel(%arg0: i32, %arg1: memref<512x128xf32, #tpu.memory_space<vmem>>, %arg2: memref<1x128xf32, #tpu.memory_space<vmem>>, %arg3: memref<1x128xf32, #tpu.memory_space<vmem>>, %arg4: memref<512x128xf32, #tpu.memory_space<vmem>>) attributes {dimension_semantics = [#tpu.dimension_semantics<parallel>], iteration_bounds = array<i64: 1>, scalar_prefetch = 0 : i64, scratch_operands = 0 : i64, tpu.core_type = #tpu.core_type<tc>, window_params = [{transform_indices = @transform_0, window_bounds = array<i64: 512, 128>}, {pipeline_mode = #tpu.pipeline_mode<synchronous>, transform_indices = @transform_1, window_bounds = array<i64: 1, 128>}, {pipeline_mode = #tpu.pipeline_mode<synchronous>, transform_indices = @transform_2, window_bounds = array<i64: 1, 128>}, {transform_indices = @transform_3, window_bounds = array<i64: 512, 128>}]} {
    %c0 = arith.constant 0 : index
    %c0_0 = arith.constant 0 : index
    %0 = vector.load %arg1[%c0, %c0_0] : memref<512x128xf32, #tpu.memory_space<vmem>>, vector<512x128xf32>
    %c0_1 = arith.constant 0 : index
    %c0_2 = arith.constant 0 : index
    %1 = vector.load %arg2[%c0_1, %c0_2] : memref<1x128xf32, #tpu.memory_space<vmem>>, vector<1x128xf32>
    %2 = vector.broadcast %1 : vector<1x128xf32> to vector<512x128xf32>
    %3 = arith.mulf %0, %2 : vector<512x128xf32>
    %c0_3 = arith.constant 0 : index
    %c0_4 = arith.constant 0 : index
    %4 = vector.load %arg3[%c0_3, %c0_4] : memref<1x128xf32, #tpu.memory_space<vmem>>, vector<1x128xf32>
    %5 = vector.broadcast %4 : vector<1x128xf32> to vector<512x128xf32>
    %6 = arith.addf %3, %5 : vector<512x128xf32>
    %cst = arith.constant 0.000000e+00 : f32
    %7 = vector.broadcast %cst : f32 to vector<512x128xf32>
    %8 = arith.cmpf oge, %6, %7 : vector<512x128xf32>
    %cst_5 = arith.constant 0.00999999977 : f32
    %9 = vector.broadcast %cst_5 : f32 to vector<512x128xf32>
    %10 = arith.mulf %9, %6 : vector<512x128xf32>
    %11 = arith.select %8, %6, %10 : vector<512x128xi1>, vector<512x128xf32>
    %c0_6 = arith.constant 0 : index
    %c0_7 = arith.constant 0 : index
    %12 = vector.load %arg4[%c0_6, %c0_7] : memref<512x128xf32, #tpu.memory_space<vmem>>, vector<512x128xf32>
    tpu.vector_store %arg4[%c0_6, %c0_7], %11 {strides = array<i32>} : memref<512x128xf32, #tpu.memory_space<vmem>>, vector<512x128xf32>,
    return
  }
  func.func @transform_0(%arg0: i32) -> (i32, i32) {
    %c0_i32 = arith.constant 0 : i32
    %c0_i32_0 = arith.constant 0 : i32
    return %arg0, %c0_i32 : i32, i32
  }
  func.func @transform_1(%arg0: i32) -> (i32, i32) {
    %c0_i32 = arith.constant 0 : i32
    %c0_i32_0 = arith.constant 0 : i32
    %c0_i32_1 = arith.constant 0 : i32
    return %c0_i32, %c0_i32_0 : i32, i32
  }
  func.func @transform_2(%arg0: i32) -> (i32, i32) {
    %c0_i32 = arith.constant 0 : i32
    %c0_i32_0 = arith.constant 0 : i32
    %c0_i32_1 = arith.constant 0 : i32
    return %c0_i32, %c0_i32_0 : i32, i32
  }
  func.func @transform_3(%arg0: i32) -> (i32, i32) {
    %c0_i32 = arith.constant 0 : i32
    %c0_i32_0 = arith.constant 0 : i32
    return %arg0, %c0_i32 : i32, i32
  }
}

</mosaic_0001>

<llo_original>
// kernel: upstream_block_2d_forward.5
$region0: #{upstream_block_2d_forward.5}
  #allocation0 [shape = 'u32[]', space=smem, size = 0x4, offset = 0x4, fixed_abs, tag = 'smem constant byte address 0x4 - core index']
  #allocation1 [shape = 'u32[144,128]{1,0:T(1,128)}', space=vmem, size = 0x12000, scoped, tag = 'internal scratch']
  %s0 = inlined_call_operand.vmem [shape: bf16[4,128,16], index: 0, kind: input, shape index: {}]
  %s1 = inlined_call_operand.vmem [shape: bf16[4,16,128], index: 1, kind: input, shape index: {}]
  %s2 = inlined_call_operand.vmem [shape: f32[1,128], index: 2, kind: input, shape index: {}]
  %s3 = inlined_call_operand.vmem [shape: f32[4,128,128], index: 3, kind: output, shape index: {}]
  %s4 = sld [smem:[#allocation0]]
  $region45: #{upstream_block_2d_forward.5} parent=0
    _
  %s6 = ssub.s32 1, %s4
  %s7 = scalar_select 0, %s6, %s4
  loop: start=0, step=1, limit=6
  $region2: #{upstream_block_2d_forward.5} parent=0 // loop_pre_header
    _
  $region3: #{upstream_block_2d_forward.5} parent=0 // loop_header
    %s9 = sphi 0, %s13
    %p10 = scmp.ge.s32.totalorder %s9, 6
    %s16 = sphi 0, %s28
    %s17 = sphi 0, %s24
    %s18 = sphi 0, %s16
    %s19 = sphi 0, %s17
    %s20 = sphi 0, %s18
    %s21 = sphi 0, %s19
    %s33 = sphi 0, %s35
    %s36 = sphi 0, %s33
    %s37 = sphi 0, %s36
    %s53 = sphi 0, %s37
    %s59 = sphi 0, %s61
    %s62 = sphi 0, %s59
    %s63 = sphi 0, %s62
    %s79 = sphi 0, %s63
    %s83 = sphi 0, %s83
    %s85 = sphi 0, %s83
    %s86 = sphi 0, %s85
    %s100 = sphi 0, %s86
    %s108 = sphi 0, %s110
    %s111 = sphi 0, %s108
    %s112 = sphi 0, %s111
    %s128 = sphi 0, %s112
  $region4: #{upstream_block_2d_forward.5} parent=0 // loop_header_branch
    %12 = sbr.rel (%p10) target = $region8
  $region5: #{upstream_block_2d_forward.5} parent=0 // loop_body
    %s14 = ssub.s32 %s9, 1
    %s15 = ssub.s32 %s9, 2
    %s22 = sadd.s32 1, %s17
    %p23 = scmp.ge.s32.totalorder %s22, 1
    %s24 = scalar_select %p23, 0, %s22
    %s25 = sadd.s32 1, %s16
    %s26 = scalar_select %p23, %s25, %s16
    %p27 = scmp.ge.s32.totalorder %s26, 4
    %s28 = scalar_select %p27, 0, %s26
    %s29 = ssub.s32 %s16, %s28
    %s30 = ssub.s32 %s17, %s24
    %s31 = sor.u32 %s29, %s30
    %p32 = scmp.eq.s32.totalorder %s31, 0
    %s34 = sadd.s32 %s33, 1
    %s35 = scalar_select %p32, %s33, %s34
    %p38 = pneg %p32
    %p39 = scmp.eq.s32.totalorder %s9, 3
    %p40 = por %p38, %p39
    %p41 = scmp.ne.s32.totalorder %s33, %s36
    %p42 = scmp.eq.s32.totalorder %s9, 0
    %p43 = por %p41, %p42
    %p44 = scmp.ne.s32.totalorder %s33, %s36
    %p45 = scmp.eq.s32.totalorder %s14, 3
    %p46 = por %p44, %p45
    %p47 = scmp.ne.s32.totalorder %s36, %s37
    %p48 = scmp.eq.s32.totalorder %s14, 0
    %p49 = por %p47, %p48
    %p50 = scmp.ne.s32.totalorder %s36, %s37
    %p51 = scmp.eq.s32.totalorder %s15, 3
    %p52 = por %p50, %p51
    %p54 = scmp.ne.s32.totalorder %s37, %s53
    %p55 = scmp.eq.s32.totalorder %s15, 0
    %p56 = por %p54, %p55
    %s57 = ssub.s32 %s16, %s28
    %p58 = scmp.eq.s32.totalorder %s57, 0
    %s60 = sadd.s32 %s59, 1
    %s61 = scalar_select %p58, %s59, %s60
    %p64 = pneg %p58
    %p65 = scmp.eq.s32.totalorder %s9, 3
    %p66 = por %p64, %p65
    %p67 = scmp.ne.s32.totalorder %s59, %s62
    %p68 = scmp.eq.s32.totalorder %s9, 0
    %p69 = por %p67, %p68
    %p70 = scmp.ne.s32.totalorder %s59, %s62
    %p71 = scmp.eq.s32.totalorder %s14, 3
    %p72 = por %p70, %p71
    %p73 = scmp.ne.s32.totalorder %s62, %s63
    %p74 = scmp.eq.s32.totalorder %s14, 0
    %p75 = por %p73, %p74
    %p76 = scmp.ne.s32.totalorder %s62, %s63
    %p77 = scmp.eq.s32.totalorder %s15, 3
    %p78 = por %p76, %p77
    %p80 = scmp.ne.s32.totalorder %s63, %s79
    %p81 = scmp.eq.s32.totalorder %s15, 0
    %p82 = por %p80, %p81
    %s84 = sadd.s32 %s83, 1
    %p87 = scmp.eq.s32.totalorder %s9, 3
    %p88 = scmp.ne.s32.totalorder %s83, %s85
    %p89 = scmp.eq.s32.totalorder %s9, 0
    %p90 = por %p88, %p89
    %p91 = scmp.ne.s32.totalorder %s83, %s85
    %p92 = scmp.eq.s32.totalorder %s14, 3
    %p93 = por %p91, %p92
    %p94 = scmp.ne.s32.totalorder %s85, %s86
    %p95 = scmp.eq.s32.totalorder %s14, 0
    %p96 = por %p94, %p95
    %p97 = scmp.ne.s32.totalorder %s85, %s86
    %p98 = scmp.eq.s32.totalorder %s15, 3
    %p99 = por %p97, %p98
    %p101 = scmp.ne.s32.totalorder %s86, %s100
    %p102 = scmp.eq.s32.totalorder %s15, 0
    %p103 = por %p101, %p102
    %s104 = ssub.s32 %s16, %s28
    %s105 = ssub.s32 %s17, %s24
    %s106 = sor.u32 %s104, %s105
    %p107 = scmp.eq.s32.totalorder %s106, 0
    %s109 = sadd.s32 %s108, 1
    %s110 = scalar_select %p107, %s108, %s109
    %p113 = pneg %p107
    %p114 = scmp.eq.s32.totalorder %s9, 3
    %p115 = por %p113, %p114
    %p116 = scmp.ne.s32.totalorder %s108, %s111
    %p117 = scmp.eq.s32.totalorder %s9, 0
    %p118 = por %p116, %p117
    %p119 = scmp.ne.s32.totalorder %s108, %s111
    %p120 = scmp.eq.s32.totalorder %s14, 3
    %p121 = por %p119, %p120
    %p122 = scmp.ne.s32.totalorder %s111, %s112
    %p123 = scmp.eq.s32.totalorder %s14, 0
    %p124 = por %p122, %p123
    %p125 = scmp.ne.s32.totalorder %s111, %s112
    %p126 = scmp.eq.s32.totalorder %s15, 3
    %p127 = por %p125, %p126
    %p129 = scmp.ne.s32.totalorder %s112, %s128
    %p130 = scmp.eq.s32.totalorder %s15, 0
    %p131 = por %p129, %p130
    %p132 = scmp.le.s32.totalorder 1, %s9
    %p133 = scmp.lt.s32.totalorder %s9, 5
    %p134 = pnand %p132, %p133
    %p135 = pneg %p134
    // Predicated region
    $region9: #{upstream_block_2d_forward.5} parent=5 // pred_check
      _
    $region10: #{upstream_block_2d_forward.5} parent=5 // pred_check_branch
      %137 = sbr.rel (%p134) target = $region12
    $region11: #{upstream_block_2d_forward.5} parent=5 // pred_region
      %s138 = ssub.s32 %s9, 1
      // Predicated region
      $region13: #{upstream_block_2d_forward.5} parent=11 // pred_check
        %p139 = pneg %p96
      $region14: #{upstream_block_2d_forward.5} parent=11 // pred_check_branch
        %141 = sbr.rel (%p139) target = $region16
      $region15: #{upstream_block_2d_forward.5} parent=11 // pred_region
        _
      $region16: #{upstream_block_2d_forward.5} parent=11 // pred_fallthru
        _
    $region12: #{upstream_block_2d_forward.5} parent=5 // pred_fallthru
      _
    %p142 = scmp.lt.s32.totalorder %s9, 4
    // Predicated region
    $region17: #{upstream_block_2d_forward.5} parent=5 // pred_check
      %p143 = pneg %p142
    $region18: #{upstream_block_2d_forward.5} parent=5 // pred_check_branch
      %145 = sbr.rel (%p143) target = $region20
    $region19: #{upstream_block_2d_forward.5} parent=5 // pred_region
      // Predicated region
      $region21: #{upstream_block_2d_forward.5} parent=19 // pred_check
        %p146 = pneg %p43
      $region22: #{upstream_block_2d_forward.5} parent=19 // pred_check_branch
        %148 = sbr.rel (%p146) target = $region24
      $region23: #{upstream_block_2d_forward.5} parent=19 // pred_region
        %s149 = smul.u32 16, %s17
        %p150 = scmp.lt.s32.totalorder %s16, 3
        %s151 = scalar_select %p150, %s16, 3
        %p152 = scmp.lt.s32.totalorder %s149, 15
        %s153 = scalar_select %p152, %s149, 15
        %s154 = smul.addr %s151, 16
        %s155 = sadd.s32 %s153, %s154
        %s156 = smul.addr %s155, 4
        %s157 = scalar_lea.vmem %s0, %s156
        %s158 = smul.u32 16, %s17
      $region24: #{upstream_block_2d_forward.5} parent=19 // pred_fallthru
        _
      // Predicated region
      $region25: #{upstream_block_2d_forward.5} parent=19 // pred_check
        %p159 = pneg %p69
      $region26: #{upstream_block_2d_forward.5} parent=19 // pred_check_branch
        %161 = sbr.rel (%p159) target = $region28
      $region27: #{upstream_block_2d_forward.5} parent=19 // pred_region
        %p162 = scmp.lt.s32.totalorder %s16, 3
        %s163 = scalar_select %p162, %s16, 3
        %s164 = smul.addr %s163, 2
        %s165 = smul.addr %s164, 4
        %s166 = scalar_lea.vmem %s1, %s165
      $region28: #{upstream_block_2d_forward.5} parent=19 // pred_fallthru
        _
    $region20: #{upstream_block_2d_forward.5} parent=5 // pred_fallthru
      _
    %p167 = scmp.le.s32.totalorder 1, %s9
    %p168 = scmp.lt.s32.totalorder %s9, 5
    %p169 = pnand %p167, %p168
    %p170 = pneg %p169
    // Predicated region
    $region29: #{upstream_block_2d_forward.5} parent=5 // pred_check
      _
    $region30: #{upstream_block_2d_forward.5} parent=5 // pred_check_branch
      %172 = sbr.rel (%p169) target = $region32
    $region31: #{upstream_block_2d_forward.5} parent=5 // pred_region
      %s173 = ssub.s32 %s9, 1
      %s174 = smul.u32 16, %s19
      %p175 = scmp.lt.s32.totalorder %s18, 3
      %s176 = scalar_select %p175, %s18, 3
      %p177 = scmp.lt.s32.totalorder %s174, 15
      %s178 = scalar_select %p177, %s174, 15
      %s179 = smul.addr %s176, 16
      %s180 = sadd.s32 %s178, %s179
      %s181 = smul.addr %s180, 4
      %s182 = scalar_lea.vmem %s0, %s181
      %p183 = pneg %p49
      %p184 = pneg %p46
      %p185 = scmp.lt.s32.totalorder %s18, 3
      %s186 = scalar_select %p185, %s18, 3
      %s187 = smul.addr %s186, 2
      %s188 = smul.addr %s187, 4
      %s189 = scalar_lea.vmem %s1, %s188
      %p190 = pneg %p75
      %p191 = pneg %p72
      %p192 = pneg %p96
      %p193 = pneg %p93
      %p194 = pneg %p124
      %p195 = pneg %p121
      %s196 = smul.u32 16, %s19
      %p197 = scmp.lt.s32.totalorder %s18, 3
      %s198 = scalar_select %p197, %s18, 3
      %p199 = scmp.lt.s32.totalorder %s196, 15
      %s200 = scalar_select %p199, %s196, 15
      %s201 = smul.addr %s198, 16
      %s202 = sadd.s32 %s200, %s201
      %s203 = smul.addr %s202, 8
      %s204 = scalar_lea.vmem %s3, %s203
      %s205 = smul.u32 16, %s19
      %p206 = scmp.lt.s32.totalorder %s18, 3
      %s207 = scalar_select %p206, %s18, 3
      %p208 = scmp.lt.s32.totalorder %s205, 15
      %s209 = scalar_select %p208, %s205, 15
      %s210 = smul.addr %s207, 16
      %s211 = sadd.s32 %s209, %s210
      %s212 = smul.addr %s211, 4
      %s213 = scalar_lea.vmem %s0, %s212
      %s214 = smul.u32 16, %s19
      %p215 = scmp.lt.s32.totalorder %s18, 3
      %s216 = scalar_select %p215, %s18, 3
      %s217 = smul.addr %s216, 2
      %s218 = smul.addr %s217, 4
      %s219 = scalar_lea.vmem %s1, %s218
      %s220 = smul.u32 16, %s19
      %p221 = scmp.lt.s32.totalorder %s18, 3
      %s222 = scalar_select %p221, %s18, 3
      %p223 = scmp.lt.s32.totalorder %s220, 15
      %s224 = scalar_select %p223, %s220, 15
      %s225 = smul.addr %s222, 16
      %s226 = sadd.s32 %s224, %s225
      %s227 = smul.addr %s226, 8
      %s228 = scalar_lea.vmem %s3, %s227
      %s229 = smul.u32 16, %s19
      %v231 = vld [vmem:[%s213] sm:$0xf]
      %v232 = vld [vmem:[%s213 + $0x4] sm:$0xf]
      %v233 = vld [vmem:[%s213 + $0x8] sm:$0xf]
      %v234 = vld [vmem:[%s213 + $0xc] sm:$0xf]
      %v235 = vld [vmem:[%s213 + $0x10] sm:$0xf]
      %v236 = vld [vmem:[%s213 + $0x14] sm:$0xf]
      %v237 = vld [vmem:[%s213 + $0x18] sm:$0xf]
      %v238 = vld [vmem:[%s213 + $0x1c] sm:$0xf]
      %v239 = vld [vmem:[%s213 + $0x20] sm:$0xf]
      %v240 = vld [vmem:[%s213 + $0x24] sm:$0xf]
      %v241 = vld [vmem:[%s213 + $0x28] sm:$0xf]
      %v242 = vld [vmem:[%s213 + $0x2c] sm:$0xf]
      %v243 = vld [vmem:[%s213 + $0x30] sm:$0xf]
      %v244 = vld [vmem:[%s213 + $0x34] sm:$0xf]
      %v245 = vld [vmem:[%s213 + $0x38] sm:$0xf]
      %v246 = vld [vmem:[%s213 + $0x3c] sm:$0xf]
      %v247 = vld [vmem:[%s219] sm:$0xf]
      %v248 = vld [vmem:[%s219 + $0x4] sm:$0xf]
      %v249 = vld [vmem:[%s2] sm:$0x1]
      %v251 = vlaneseq
      %v252 = vshrl.u32 %v251, 7
      %v253 = vsub.s32 0, %v252
      %v254 = vrot.slane %v249, %v253
      %v272 = vunpack.c.l.b16 %v231
      %v273 = vunpack.c.l.b16 %v232
      %v274 = vunpack.c.l.b16 %v233
      %v275 = vunpack.c.l.b16 %v234
      %v276 = vunpack.c.l.b16 %v235
      %v277 = vunpack.c.l.b16 %v236
      %v278 = vunpack.c.l.b16 %v237
      %v279 = vunpack.c.l.b16 %v238
      %v280 = vunpack.c.l.b16 %v239
      %v281 = vunpack.c.l.b16 %v240
      %v282 = vunpack.c.l.b16 %v241
      %v283 = vunpack.c.l.b16 %v242
      %v284 = vunpack.c.l.b16 %v243
      %v285 = vunpack.c.l.b16 %v244
      %v286 = vunpack.c.l.b16 %v245
      %v287 = vunpack.c.l.b16 %v246
      %v288 = vpack.c.b16 %v273, %v272
      %v289 = vpack.c.b16 %v275, %v274
      %v290 = vpack.c.b16 %v277, %v276
      %v291 = vpack.c.b16 %v279, %v278
      %v292 = vpack.c.b16 %v281, %v280
      %v293 = vpack.c.b16 %v283, %v282
      %v294 = vpack.c.b16 %v285, %v284
      %v295 = vpack.c.b16 %v287, %v286
      %v298 = vunpack.c.l.b16 %v247
      %v299 = vunpack.c.l.b16 %v248
      %v300 = vpack.c.b16 %v299, %v298
      %vm302 = vcmask 130048
      %v304 = vsel %vm302, %v288, 0
      %v307 = vsel %vm302, %v289, 0
      %v310 = vsel %vm302, %v290, 0
      %v313 = vsel %vm302, %v291, 0
      %v316 = vsel %vm302, %v292, 0
      %v319 = vsel %vm302, %v293, 0
      %v322 = vsel %vm302, %v294, 0
      %v325 = vsel %vm302, %v295, 0
      %327 = vmatprep.subr.bf16.mxu0 0
      %328 = vmatpush1.bf16.msra.mxu0 %v300
      %329 = vmatprep.subr.bf16.mxu0 0
      %330 = vmatpush1.bf16.msra.mxu0 0
      %331 = vmatprep.subr.bf16.mxu0 0
      %332 = vmatpush1.bf16.msra.mxu0 0
      %333 = vmatprep.subr.bf16.mxu0 0
      %334 = vmatpush1.bf16.msra.mxu0 0
      %335 = vmatprep.subr.bf16.mxu0 0
      %336 = vmatpush1.bf16.msra.mxu0 0
      %337 = vmatprep.subr.bf16.mxu0 0
      %338 = vmatpush1.bf16.msra.mxu0 0
      %339 = vmatprep.subr.bf16.mxu0 0
      %340 = vmatpush1.bf16.msra.mxu0 0
      %341 = vmatprep.subr.bf16.mxu0 0
      %342 = vmatpush1.bf16.msra.mxu0 0
      %343 = vmatprep.subr.bf16.mxu0 0
      %344 = vmatpush1.bf16.msra.mxu0 0
      %345 = vmatprep.subr.bf16.mxu0 0
      %346 = vmatpush1.bf16.msra.mxu0 0
      %347 = vmatprep.subr.bf16.mxu0 0
      %348 = vmatpush1.bf16.msra.mxu0 0
      %349 = vmatprep.subr.bf16.mxu0 0
      %350 = vmatpush1.bf16.msra.mxu0 0
      %351 = vmatprep.subr.bf16.mxu0 0
      %352 = vmatpush1.bf16.msra.mxu0 0
      %353 = vmatprep.subr.bf16.mxu0 0
      %354 = vmatpush1.bf16.msra.mxu0 0
      %355 = vmatprep.subr.bf16.mxu0 0
      %356 = vmatpush1.bf16.msra.mxu0 0
      %357 = vmatprep.subr.bf16.mxu0 0
      %358 = vmatpush1.bf16.msra.mxu0 0
      %359 = vmatprep.mubr.bf16.mxu0 0
      %360 = vmatmul.mubr.bf16.gmra.mrb[0].mxu0 %v304
      %v361 = vpop.f32.mrb[0].mxu0
      %v362 = vadd.f32 %v254, %v361
      %v363 = vpop.f32.mrb[0].mxu0
      %v364 = vpop.f32.mrb[0].mxu0
      %v365 = vadd.f32 %v254, %v364
      %v366 = vpop.f32.mrb[0].mxu0
      %367 = vmatprep.mubr.bf16.mxu0 0
      %368 = vmatmul.mubr.bf16.gmra.mrb[0].mxu0 %v307
      %v369 = vpop.f32.mrb[0].mxu0
      %v370 = vadd.f32 %v254, %v369
      %v371 = vpop.f32.mrb[0].mxu0
      %v372 = vpop.f32.mrb[0].mxu0
      %v373 = vadd.f32 %v254, %v372
      %v374 = vpop.f32.mrb[0].mxu0
      %375 = vmatprep.mubr.bf16.mxu0 0
      %376 = vmatmul.mubr.bf16.gmra.mrb[0].mxu0 %v310
      %v377 = vpop.f32.mrb[0].mxu0
      %v378 = vadd.f32 %v254, %v377
      %v379 = vpop.f32.mrb[0].mxu0
      %v380 = vpop.f32.mrb[0].mxu0
      %v381 = vadd.f32 %v254, %v380
      %v382 = vpop.f32.mrb[0].mxu0
      %383 = vmatprep.mubr.bf16.mxu0 0
      %384 = vmatmul.mubr.bf16.gmra.mrb[0].mxu0 %v313
      %v385 = vpop.f32.mrb[0].mxu0
      %v386 = vadd.f32 %v254, %v385
      %v387 = vpop.f32.mrb[0].mxu0
      %v388 = vpop.f32.mrb[0].mxu0
      %v389 = vadd.f32 %v254, %v388
      %v390 = vpop.f32.mrb[0].mxu0
      %391 = vmatprep.mubr.bf16.mxu0 0
      %392 = vmatmul.mubr.bf16.gmra.mrb[0].mxu0 %v316
      %v393 = vpop.f32.mrb[0].mxu0
      %v394 = vadd.f32 %v254, %v393
      %v395 = vpop.f32.mrb[0].mxu0
      %v396 = vpop.f32.mrb[0].mxu0
      %v397 = vadd.f32 %v254, %v396
      %v398 = vpop.f32.mrb[0].mxu0
      %399 = vmatprep.mubr.bf16.mxu0 0
      %400 = vmatmul.mubr.bf16.gmra.mrb[0].mxu0 %v319
      %v401 = vpop.f32.mrb[0].mxu0
      %v402 = vadd.f32 %v254, %v401
      %v403 = vpop.f32.mrb[0].mxu0
      %v404 = vpop.f32.mrb[0].mxu0
      %v405 = vadd.f32 %v254, %v404
      %v406 = vpop.f32.mrb[0].mxu0
      %407 = vmatprep.mubr.bf16.mxu0 0
      %408 = vmatmul.mubr.bf16.gmra.mrb[0].mxu0 %v322
      %v409 = vpop.f32.mrb[0].mxu0
      %v410 = vadd.f32 %v254, %v409
      %v411 = vpop.f32.mrb[0].mxu0
      %v412 = vpop.f32.mrb[0].mxu0
      %v413 = vadd.f32 %v254, %v412
      %v414 = vpop.f32.mrb[0].mxu0
      %415 = vmatprep.mubr.bf16.mxu0 0
      %416 = vmatmul.mubr.bf16.gmra.mrb[0].mxu0 %v325
      %v417 = vpop.f32.mrb[0].mxu0
      %v418 = vadd.f32 %v254, %v417
      %v419 = vpop.f32.mrb[0].mxu0
      %v420 = vpop.f32.mrb[0].mxu0
      %v421 = vadd.f32 %v254, %v420
      %v422 = vpop.f32.mrb[0].mxu0
      %423 = vdwg.mxu0
      %424 = vst [vmem:[%s228] sm:$0xff] %v362
      %425 = vst [vmem:[%s228 + $0x8] sm:$0xff] %v365
      %426 = vst [vmem:[%s228 + $0x10] sm:$0xff] %v370
      %427 = vst [vmem:[%s228 + $0x18] sm:$0xff] %v373
      %428 = vst [vmem:[%s228 + $0x20] sm:$0xff] %v378
      %429 = vst [vmem:[%s228 + $0x28] sm:$0xff] %v381
      %430 = vst [vmem:[%s228 + $0x30] sm:$0xff] %v386
      %431 = vst [vmem:[%s228 + $0x38] sm:$0xff] %v389
      %432 = vst [vmem:[%s228 + $0x40] sm:$0xff] %v394
      %433 = vst [vmem:[%s228 + $0x48] sm:$0xff] %v397
      %434 = vst [vmem:[%s228 + $0x50] sm:$0xff] %v402
      %435 = vst [vmem:[%s228 + $0x58] sm:$0xff] %v405
      %436 = vst [vmem:[%s228 + $0x60] sm:$0xff] %v410
      %437 = vst [vmem:[%s228 + $0x68] sm:$0xff] %v413
      %438 = vst [vmem:[%s228 + $0x70] sm:$0xff] %v418
      %439 = vst [vmem:[%s228 + $0x78] sm:$0xff] %v421
      %s440 = smul.u32 16, %s19
      %p441 = scmp.lt.s32.totalorder %s18, 3
      %s442 = scalar_select %p441, %s18, 3
      %p443 = scmp.lt.s32.totalorder %s440, 15
      %s444 = scalar_select %p443, %s440, 15
      %s445 = smul.addr %s442, 16
      %s446 = sadd.s32 %s444, %s445
      %s447 = smul.addr %s446, 8
      %s448 = scalar_lea.vmem %s3, %s447
      // Predicated region
      $region33: #{upstream_block_2d_forward.5} parent=31 // pred_check
        %p449 = pneg %p121
      $region34: #{upstream_block_2d_forward.5} parent=31 // pred_check_branch
        %451 = sbr.rel (%p449) target = $region36
      $region35: #{upstream_block_2d_forward.5} parent=31 // pred_region
        %s452 = smul.u32 16, %s19
      $region36: #{upstream_block_2d_forward.5} parent=31 // pred_fallthru
        _
    $region32: #{upstream_block_2d_forward.5} parent=5 // pred_fallthru
      _
    %p453 = scmp.le.s32.totalorder 2, %s9
    // Predicated region
    $region37: #{upstream_block_2d_forward.5} parent=5 // pred_check
      %p454 = pneg %p453
    $region38: #{upstream_block_2d_forward.5} parent=5 // pred_check_branch
      %456 = sbr.rel (%p454) target = $region40
    $region39: #{upstream_block_2d_forward.5} parent=5 // pred_region
      %s457 = ssub.s32 %s9, 2
      // Predicated region
      $region41: #{upstream_block_2d_forward.5} parent=39 // pred_check
        %p458 = pneg %p127
      $region42: #{upstream_block_2d_forward.5} parent=39 // pred_check_branch
        %460 = sbr.rel (%p458) target = $region44
      $region43: #{upstream_block_2d_forward.5} parent=39 // pred_region
        %s461 = smul.u32 16, %s21
        %p462 = scmp.lt.s32.totalorder %s20, 3
        %s463 = scalar_select %p462, %s20, 3
        %p464 = scmp.lt.s32.totalorder %s461, 15
        %s465 = scalar_select %p464, %s461, 15
        %s466 = smul.addr %s463, 16
        %s467 = sadd.s32 %s465, %s466
        %s468 = smul.addr %s467, 8
        %s469 = scalar_lea.vmem %s3, %s468
      $region44: #{upstream_block_2d_forward.5} parent=39 // pred_fallthru
        _
    $region40: #{upstream_block_2d_forward.5} parent=5 // pred_fallthru
      _
  $region6: #{upstream_block_2d_forward.5} parent=0 // loop_footer
    %s13 = sadd.s32 1, %s9
  $region7: #{upstream_block_2d_forward.5} parent=0 // loop_footer_branch
    %8 = sbr.rel target = $region3
  $region8: #{upstream_block_2d_forward.5} parent=0 // loop_exit
    _

// kernel: upstream_block_2d_forward.7
$region0: #{upstream_block_2d_forward.7}
  #allocation0 [shape = 'u32[]', space=smem, size = 0x4, offset = 0x4, fixed_abs, tag = 'smem constant byte address 0x4 - core index']
  #allocation1 [shape = 'u32[144,128]{1,0:T(1,128)}', space=vmem, size = 0x12000, scoped, tag = 'internal scratch']
  %s0 = inlined_call_operand.vmem [shape: f32[512,128], index: 0, kind: input, shape index: {}]
  %s1 = inlined_call_operand.vmem [shape: f32[1,128], index: 1, kind: input, shape index: {}]
  %s2 = inlined_call_operand.vmem [shape: f32[1,128], index: 2, kind: input, shape index: {}]
  %s3 = inlined_call_operand.vmem [shape: f32[512,128], index: 3, kind: output, shape index: {}]
  %s4 = sld [smem:[#allocation0]]
  $region22: #{upstream_block_2d_forward.7} parent=0
    _
  %s6 = ssub.s32 1, %s4
  %s7 = scalar_select 0, %s6, %s4
  // Predicated region
  $region2: #{upstream_block_2d_forward.7} parent=0 // pred_check
    _
  $region3: #{upstream_block_2d_forward.7} parent=0 // pred_check_branch
    %9 = sbr.rel (0) target = $region5
  $region4: #{upstream_block_2d_forward.7} parent=0 // pred_region
    _
  $region5: #{upstream_block_2d_forward.7} parent=0 // pred_fallthru
    _
  // Predicated region
  $region6: #{upstream_block_2d_forward.7} parent=0 // pred_check
    _
  $region7: #{upstream_block_2d_forward.7} parent=0 // pred_check_branch
    %11 = sbr.rel (0) target = $region9
  $region8: #{upstream_block_2d_forward.7} parent=0 // pred_region
    _
  $region9: #{upstream_block_2d_forward.7} parent=0 // pred_fallthru
    _
  // Predicated region
  $region10: #{upstream_block_2d_forward.7} parent=0 // pred_check
    _
  $region11: #{upstream_block_2d_forward.7} parent=0 // pred_check_branch
    %13 = sbr.rel (0) target = $region13
  $region12: #{upstream_block_2d_forward.7} parent=0 // pred_region
    _
  $region13: #{upstream_block_2d_forward.7} parent=0 // pred_fallthru
    _
  %v14 = vld [vmem:[%s0] sm:$0xff]
  %v15 = vld [vmem:[%s0 + $0x8] sm:$0xff]
  %v16 = vld [vmem:[%s0 + $0x10] sm:$0xff]
  %v17 = vld [vmem:[%s0 + $0x18] sm:$0xff]
  %v18 = vld [vmem:[%s0 + $0x20] sm:$0xff]
  %v19 = vld [vmem:[%s0 + $0x28] sm:$0xff]
  %v20 = vld [vmem:[%s0 + $0x30] sm:$0xff]
  %v21 = vld [vmem:[%s0 + $0x38] sm:$0xff]
  %v22 = vld [vmem:[%s0 + $0x40] sm:$0xff]
  %v23 = vld [vmem:[%s0 + $0x48] sm:$0xff]
  %v24 = vld [vmem:[%s0 + $0x50] sm:$0xff]
  %v25 = vld [vmem:[%s0 + $0x58] sm:$0xff]
  %v26 = vld [vmem:[%s0 + $0x60] sm:$0xff]
  %v27 = vld [vmem:[%s0 + $0x68] sm:$0xff]
  %v28 = vld [vmem:[%s0 + $0x70] sm:$0xff]
  %v29 = vld [vmem:[%s0 + $0x78] sm:$0xff]
  %v30 = vld [vmem:[%s0 + $0x80] sm:$0xff]
  %v31 = vld [vmem:[%s0 + $0x88] sm:$0xff]
  %v32 = vld [vmem:[%s0 + $0x90] sm:$0xff]
  %v33 = vld [vmem:[%s0 + $0x98] sm:$0xff]
  %v34 = vld [vmem:[%s0 + $0xa0] sm:$0xff]
  %v35 = vld [vmem:[%s0 + $0xa8] sm:$0xff]
  %v36 = vld [vmem:[%s0 + $0xb0] sm:$0xff]
  %v37 = vld [vmem:[%s0 + $0xb8] sm:$0xff]
  %v38 = vld [vmem:[%s0 + $0xc0] sm:$0xff]
  %v39 = vld [vmem:[%s0 + $0xc8] sm:$0xff]
  %v40 = vld [vmem:[%s0 + $0xd0] sm:$0xff]
  %v41 = vld [vmem:[%s0 + $0xd8] sm:$0xff]
  %v42 = vld [vmem:[%s0 + $0xe0] sm:$0xff]
  %v43 = vld [vmem:[%s0 + $0xe8] sm:$0xff]
  %v44 = vld [vmem:[%s0 + $0xf0] sm:$0xff]
  %v45 = vld [vmem:[%s0 + $0xf8] sm:$0xff]
  %v46 = vld [vmem:[%s0 + $0x100] sm:$0xff]
  %v47 = vld [vmem:[%s0 + $0x108] sm:$0xff]
  %v48 = vld [vmem:[%s0 + $0x110] sm:$0xff]
  %v49 = vld [vmem:[%s0 + $0x118] sm:$0xff]
  %v50 = vld [vmem:[%s0 + $0x120] sm:$0xff]
  %v51 = vld [vmem:[%s0 + $0x128] sm:$0xff]
  %v52 = vld [vmem:[%s0 + $0x130] sm:$0xff]
  %v53 = vld [vmem:[%s0 + $0x138] sm:$0xff]
  %v54 = vld [vmem:[%s0 + $0x140] sm:$0xff]
  %v55 = vld [vmem:[%s0 + $0x148] sm:$0xff]
  %v56 = vld [vmem:[%s0 + $0x150] sm:$0xff]
  %v57 = vld [vmem:[%s0 + $0x158] sm:$0xff]
  %v58 = vld [vmem:[%s0 + $0x160] sm:$0xff]
  %v59 = vld [vmem:[%s0 + $0x168] sm:$0xff]
  %v60 = vld [vmem:[%s0 + $0x170] sm:$0xff]
  %v61 = vld [vmem:[%s0 + $0x178] sm:$0xff]
  %v62 = vld [vmem:[%s0 + $0x180] sm:$0xff]
  %v63 = vld [vmem:[%s0 + $0x188] sm:$0xff]
  %v64 = vld [vmem:[%s0 + $0x190] sm:$0xff]
  %v65 = vld [vmem:[%s0 + $0x198] sm:$0xff]
  %v66 = vld [vmem:[%s0 + $0x1a0] sm:$0xff]
  %v67 = vld [vmem:[%s0 + $0x1a8] sm:$0xff]
  %v68 = vld [vmem:[%s0 + $0x1b0] sm:$0xff]
  %v69 = vld [vmem:[%s0 + $0x1b8] sm:$0xff]
  %v70 = vld [vmem:[%s0 + $0x1c0] sm:$0xff]
  %v71 = vld [vmem:[%s0 + $0x1c8] sm:$0xff]
  %v72 = vld [vmem:[%s0 + $0x1d0] sm:$0xff]
  %v73 = vld [vmem:[%s0 + $0x1d8] sm:$0xff]
  %v74 = vld [vmem:[%s0 + $0x1e0] sm:$0xff]
  %v75 = vld [vmem:[%s0 + $0x1e8] sm:$0xff]
  %v76 = vld [vmem:[%s0 + $0x1f0] sm:$0xff]
  %v77 = vld [vmem:[%s0 + $0x1f8] sm:$0xff]
  %v78 = vld [vmem:[%s1] sm:$0x1]
  %v80 = vlaneseq
  %v81 = vshrl.u32 %v80, 7
  %v82 = vsub.s32 0, %v81
  %v83 = vrot.slane %v78, %v82
  %v85 = vmul.f32 %v14, %v83
  %v86 = vmul.f32 %v15, %v83
  %v87 = vmul.f32 %v16, %v83
  %v88 = vmul.f32 %v17, %v83
  %v89 = vmul.f32 %v18, %v83
  %v90 = vmul.f32 %v19, %v83
  %v91 = vmul.f32 %v20, %v83
  %v92 = vmul.f32 %v21, %v83
  %v93 = vmul.f32 %v22, %v83
  %v94 = vmul.f32 %v23, %v83
  %v95 = vmul.f32 %v24, %v83
  %v96 = vmul.f32 %v25, %v83
  %v97 = vmul.f32 %v26, %v83
  %v98 = vmul.f32 %v27, %v83
  %v99 = vmul.f32 %v28, %v83
  %v100 = vmul.f32 %v29, %v83
  %v101 = vmul.f32 %v30, %v83
  %v102 = vmul.f32 %v31, %v83
  %v103 = vmul.f32 %v32, %v83
  %v104 = vmul.f32 %v33, %v83
  %v105 = vmul.f32 %v34, %v83
  %v106 = vmul.f32 %v35, %v83
  %v107 = vmul.f32 %v36, %v83
  %v108 = vmul.f32 %v37, %v83
  %v109 = vmul.f32 %v38, %v83
  %v110 = vmul.f32 %v39, %v83
  %v111 = vmul.f32 %v40, %v83
  %v112 = vmul.f32 %v41, %v83
  %v113 = vmul.f32 %v42, %v83
  %v114 = vmul.f32 %v43, %v83
  %v115 = vmul.f32 %v44, %v83
  %v116 = vmul.f32 %v45, %v83
  %v117 = vmul.f32 %v46, %v83
  %v118 = vmul.f32 %v47, %v83
  %v119 = vmul.f32 %v48, %v83
  %v120 = vmul.f32 %v49, %v83
  %v121 = vmul.f32 %v50, %v83
  %v122 = vmul.f32 %v51, %v83
  %v123 = vmul.f32 %v52, %v83
  %v124 = vmul.f32 %v53, %v83
  %v125 = vmul.f32 %v54, %v83
  %v126 = vmul.f32 %v55, %v83
  %v127 = vmul.f32 %v56, %v83
  %v128 = vmul.f32 %v57, %v83
  %v129 = vmul.f32 %v58, %v83
  %v130 = vmul.f32 %v59, %v83
  %v131 = vmul.f32 %v60, %v83
  %v132 = vmul.f32 %v61, %v83
  %v133 = vmul.f32 %v62, %v83
  %v134 = vmul.f32 %v63, %v83
  %v135 = vmul.f32 %v64, %v83
  %v136 = vmul.f32 %v65, %v83
  %v137 = vmul.f32 %v66, %v83
  %v138 = vmul.f32 %v67, %v83
  %v139 = vmul.f32 %v68, %v83
  %v140 = vmul.f32 %v69, %v83
  %v141 = vmul.f32 %v70, %v83
  %v142 = vmul.f32 %v71, %v83
  %v143 = vmul.f32 %v72, %v83
  %v144 = vmul.f32 %v73, %v83
  %v145 = vmul.f32 %v74, %v83
  %v146 = vmul.f32 %v75, %v83
  %v147 = vmul.f32 %v76, %v83
  %v148 = vmul.f32 %v77, %v83
  %v149 = vld [vmem:[%s2] sm:$0x1]
  %v151 = vlaneseq
  %v152 = vshrl.u32 %v151, 7
  %v153 = vsub.s32 0, %v152
  %v154 = vrot.slane %v149, %v153
  %v156 = vadd.f32 %v85, %v154
  %v157 = vadd.f32 %v86, %v154
  %v158 = vadd.f32 %v87, %v154
  %v159 = vadd.f32 %v88, %v154
  %v160 = vadd.f32 %v89, %v154
  %v161 = vadd.f32 %v90, %v154
  %v162 = vadd.f32 %v91, %v154
  %v163 = vadd.f32 %v92, %v154
  %v164 = vadd.f32 %v93, %v154
  %v165 = vadd.f32 %v94, %v154
  %v166 = vadd.f32 %v95, %v154
  %v167 = vadd.f32 %v96, %v154
  %v168 = vadd.f32 %v97, %v154
  %v169 = vadd.f32 %v98, %v154
  %v170 = vadd.f32 %v99, %v154
  %v171 = vadd.f32 %v100, %v154
  %v172 = vadd.f32 %v101, %v154
  %v173 = vadd.f32 %v102, %v154
  %v174 = vadd.f32 %v103, %v154
  %v175 = vadd.f32 %v104, %v154
  %v176 = vadd.f32 %v105, %v154
  %v177 = vadd.f32 %v106, %v154
  %v178 = vadd.f32 %v107, %v154
  %v179 = vadd.f32 %v108, %v154
  %v180 = vadd.f32 %v109, %v154
  %v181 = vadd.f32 %v110, %v154
  %v182 = vadd.f32 %v111, %v154
  %v183 = vadd.f32 %v112, %v154
  %v184 = vadd.f32 %v113, %v154
  %v185 = vadd.f32 %v114, %v154
  %v186 = vadd.f32 %v115, %v154
  %v187 = vadd.f32 %v116, %v154
  %v188 = vadd.f32 %v117, %v154
  %v189 = vadd.f32 %v118, %v154
  %v190 = vadd.f32 %v119, %v154
  %v191 = vadd.f32 %v120, %v154
  %v192 = vadd.f32 %v121, %v154
  %v193 = vadd.f32 %v122, %v154
  %v194 = vadd.f32 %v123, %v154
  %v195 = vadd.f32 %v124, %v154
  %v196 = vadd.f32 %v125, %v154
  %v197 = vadd.f32 %v126, %v154
  %v198 = vadd.f32 %v127, %v154
  %v199 = vadd.f32 %v128, %v154
  %v200 = vadd.f32 %v129, %v154
  %v201 = vadd.f32 %v130, %v154
  %v202 = vadd.f32 %v131, %v154
  %v203 = vadd.f32 %v132, %v154
  %v204 = vadd.f32 %v133, %v154
  %v205 = vadd.f32 %v134, %v154
  %v206 = vadd.f32 %v135, %v154
  %v207 = vadd.f32 %v136, %v154
  %v208 = vadd.f32 %v137, %v154
  %v209 = vadd.f32 %v138, %v154
  %v210 = vadd.f32 %v139, %v154
  %v211 = vadd.f32 %v140, %v154
  %v212 = vadd.f32 %v141, %v154
  %v213 = vadd.f32 %v142, %v154
  %v214 = vadd.f32 %v143, %v154
  %v215 = vadd.f32 %v144, %v154
  %v216 = vadd.f32 %v145, %v154
  %v217 = vadd.f32 %v146, %v154
  %v218 = vadd.f32 %v147, %v154
  %v219 = vadd.f32 %v148, %v154
  %vm220 = vcmp.ge.f32.partialorder %v156, 0.0
  %vm221 = vcmp.ge.f32.partialorder %v157, 0.0
  %vm222 = vcmp.ge.f32.partialorder %v158, 0.0
  %vm223 = vcmp.ge.f32.partialorder %v159, 0.0
  %vm224 = vcmp.ge.f32.partialorder %v160, 0.0
  %vm225 = vcmp.ge.f32.partialorder %v161, 0.0
  %vm226 = vcmp.ge.f32.partialorder %v162, 0.0
  %vm227 = vcmp.ge.f32.partialorder %v163, 0.0
  %vm228 = vcmp.ge.f32.partialorder %v164, 0.0
  %vm229 = vcmp.ge.f32.partialorder %v165, 0.0
  %vm230 = vcmp.ge.f32.partialorder %v166, 0.0
  %vm231 = vcmp.ge.f32.partialorder %v167, 0.0
  %vm232 = vcmp.ge.f32.partialorder %v168, 0.0
  %vm233 = vcmp.ge.f32.partialorder %v169, 0.0
  %vm234 = vcmp.ge.f32.partialorder %v170, 0.0
  %vm235 = vcmp.ge.f32.partialorder %v171, 0.0
  %vm236 = vcmp.ge.f32.partialorder %v172, 0.0
  %vm237 = vcmp.ge.f32.partialorder %v173, 0.0
  %vm238 = vcmp.ge.f32.partialorder %v174, 0.0
  %vm239 = vcmp.ge.f32.partialorder %v175, 0.0
  %vm240 = vcmp.ge.f32.partialorder %v176, 0.0
  %vm241 = vcmp.ge.f32.partialorder %v177, 0.0
  %vm242 = vcmp.ge.f32.partialorder %v178, 0.0
  %vm243 = vcmp.ge.f32.partialorder %v179, 0.0
  %vm244 = vcmp.ge.f32.partialorder %v180, 0.0
  %vm245 = vcmp.ge.f32.partialorder %v181, 0.0
  %vm246 = vcmp.ge.f32.partialorder %v182, 0.0
  %vm247 = vcmp.ge.f32.partialorder %v183, 0.0
  %vm248 = vcmp.ge.f32.partialorder %v184, 0.0
  %vm249 = vcmp.ge.f32.partialorder %v185, 0.0
  %vm250 = vcmp.ge.f32.partialorder %v186, 0.0
  %vm251 = vcmp.ge.f32.partialorder %v187, 0.0
  %vm252 = vcmp.ge.f32.partialorder %v188, 0.0
  %vm253 = vcmp.ge.f32.partialorder %v189, 0.0
  %vm254 = vcmp.ge.f32.partialorder %v190, 0.0
  %vm255 = vcmp.ge.f32.partialorder %v191, 0.0
  %vm256 = vcmp.ge.f32.partialorder %v192, 0.0
  %vm257 = vcmp.ge.f32.partialorder %v193, 0.0
  %vm258 = vcmp.ge.f32.partialorder %v194, 0.0
  %vm259 = vcmp.ge.f32.partialorder %v195, 0.0
  %vm260 = vcmp.ge.f32.partialorder %v196, 0.0
  %vm261 = vcmp.ge.f32.partialorder %v197, 0.0
  %vm262 = vcmp.ge.f32.partialorder %v198, 0.0
  %vm263 = vcmp.ge.f32.partialorder %v199, 0.0
  %vm264 = vcmp.ge.f32.partialorder %v200, 0.0
  %vm265 = vcmp.ge.f32.partialorder %v201, 0.0
  %vm266 = vcmp.ge.f32.partialorder %v202, 0.0
  %vm267 = vcmp.ge.f32.partialorder %v203, 0.0
  %vm268 = vcmp.ge.f32.partialorder %v204, 0.0
  %vm269 = vcmp.ge.f32.partialorder %v205, 0.0
  %vm270 = vcmp.ge.f32.partialorder %v206, 0.0
  %vm271 = vcmp.ge.f32.partialorder %v207, 0.0
  %vm272 = vcmp.ge.f32.partialorder %v208, 0.0
  %vm273 = vcmp.ge.f32.partialorder %v209, 0.0
  %vm274 = vcmp.ge.f32.partialorder %v210, 0.0
  %vm275 = vcmp.ge.f32.partialorder %v211, 0.0
  %vm276 = vcmp.ge.f32.partialorder %v212, 0.0
  %vm277 = vcmp.ge.f32.partialorder %v213, 0.0
  %vm278 = vcmp.ge.f32.partialorder %v214, 0.0
  %vm279 = vcmp.ge.f32.partialorder %v215, 0.0
  %vm280 = vcmp.ge.f32.partialorder %v216, 0.0
  %vm281 = vcmp.ge.f32.partialorder %v217, 0.0
  %vm282 = vcmp.ge.f32.partialorder %v218, 0.0
  %vm283 = vcmp.ge.f32.partialorder %v219, 0.0
  %v284 = vmul.f32 %v156, 0.01
  %v285 = vmul.f32 %v157, 0.01
  %v286 = vmul.f32 %v158, 0.01
  %v287 = vmul.f32 %v159, 0.01
  %v288 = vmul.f32 %v160, 0.01
  %v289 = vmul.f32 %v161, 0.01
  %v290 = vmul.f32 %v162, 0.01
  %v291 = vmul.f32 %v163, 0.01
  %v292 = vmul.f32 %v164, 0.01
  %v293 = vmul.f32 %v165, 0.01
  %v294 = vmul.f32 %v166, 0.01
  %v295 = vmul.f32 %v167, 0.01
  %v296 = vmul.f32 %v168, 0.01
  %v297 = vmul.f32 %v169, 0.01
  %v298 = vmul.f32 %v170, 0.01
  %v299 = vmul.f32 %v171, 0.01
  %v300 = vmul.f32 %v172, 0.01
  %v301 = vmul.f32 %v173, 0.01
  %v302 = vmul.f32 %v174, 0.01
  %v303 = vmul.f32 %v175, 0.01
  %v304 = vmul.f32 %v176, 0.01
  %v305 = vmul.f32 %v177, 0.01
  %v306 = vmul.f32 %v178, 0.01
  %v307 = vmul.f32 %v179, 0.01
  %v308 = vmul.f32 %v180, 0.01
  %v309 = vmul.f32 %v181, 0.01
  %v310 = vmul.f32 %v182, 0.01
  %v311 = vmul.f32 %v183, 0.01
  %v312 = vmul.f32 %v184, 0.01
  %v313 = vmul.f32 %v185, 0.01
  %v314 = vmul.f32 %v186, 0.01
  %v315 = vmul.f32 %v187, 0.01
  %v316 = vmul.f32 %v188, 0.01
  %v317 = vmul.f32 %v189, 0.01
  %v318 = vmul.f32 %v190, 0.01
  %v319 = vmul.f32 %v191, 0.01
  %v320 = vmul.f32 %v192, 0.01
  %v321 = vmul.f32 %v193, 0.01
  %v322 = vmul.f32 %v194, 0.01
  %v323 = vmul.f32 %v195, 0.01
  %v324 = vmul.f32 %v196, 0.01
  %v325 = vmul.f32 %v197, 0.01
  %v326 = vmul.f32 %v198, 0.01
  %v327 = vmul.f32 %v199, 0.01
  %v328 = vmul.f32 %v200, 0.01
  %v329 = vmul.f32 %v201, 0.01
  %v330 = vmul.f32 %v202, 0.01
  %v331 = vmul.f32 %v203, 0.01
  %v332 = vmul.f32 %v204, 0.01
  %v333 = vmul.f32 %v205, 0.01
  %v334 = vmul.f32 %v206, 0.01
  %v335 = vmul.f32 %v207, 0.01
  %v336 = vmul.f32 %v208, 0.01
  %v337 = vmul.f32 %v209, 0.01
  %v338 = vmul.f32 %v210, 0.01
  %v339 = vmul.f32 %v211, 0.01
  %v340 = vmul.f32 %v212, 0.01
  %v341 = vmul.f32 %v213, 0.01
  %v342 = vmul.f32 %v214, 0.01
  %v343 = vmul.f32 %v215, 0.01
  %v344 = vmul.f32 %v216, 0.01
  %v345 = vmul.f32 %v217, 0.01
  %v346 = vmul.f32 %v218, 0.01
  %v347 = vmul.f32 %v219, 0.01
  %v348 = vsel %vm220, %v156, %v284
  %v349 = vsel %vm221, %v157, %v285
  %v350 = vsel %vm222, %v158, %v286
  %v351 = vsel %vm223, %v159, %v287
  %v352 = vsel %vm224, %v160, %v288
  %v353 = vsel %vm225, %v161, %v289
  %v354 = vsel %vm226, %v162, %v290
  %v355 = vsel %vm227, %v163, %v291
  %v356 = vsel %vm228, %v164, %v292
  %v357 = vsel %vm229, %v165, %v293
  %v358 = vsel %vm230, %v166, %v294
  %v359 = vsel %vm231, %v167, %v295
  %v360 = vsel %vm232, %v168, %v296
  %v361 = vsel %vm233, %v169, %v297
  %v362 = vsel %vm234, %v170, %v298
  %v363 = vsel %vm235, %v171, %v299
  %v364 = vsel %vm236, %v172, %v300
  %v365 = vsel %vm237, %v173, %v301
  %v366 = vsel %vm238, %v174, %v302
  %v367 = vsel %vm239, %v175, %v303
  %v368 = vsel %vm240, %v176, %v304
  %v369 = vsel %vm241, %v177, %v305
  %v370 = vsel %vm242, %v178, %v306
  %v371 = vsel %vm243, %v179, %v307
  %v372 = vsel %vm244, %v180, %v308
  %v373 = vsel %vm245, %v181, %v309
  %v374 = vsel %vm246, %v182, %v310
  %v375 = vsel %vm247, %v183, %v311
  %v376 = vsel %vm248, %v184, %v312
  %v377 = vsel %vm249, %v185, %v313
  %v378 = vsel %vm250, %v186, %v314
  %v379 = vsel %vm251, %v187, %v315
  %v380 = vsel %vm252, %v188, %v316
  %v381 = vsel %vm253, %v189, %v317
  %v382 = vsel %vm254, %v190, %v318
  %v383 = vsel %vm255, %v191, %v319
  %v384 = vsel %vm256, %v192, %v320
  %v385 = vsel %vm257, %v193, %v321
  %v386 = vsel %vm258, %v194, %v322
  %v387 = vsel %vm259, %v195, %v323
  %v388 = vsel %vm260, %v196, %v324
  %v389 = vsel %vm261, %v197, %v325
  %v390 = vsel %vm262, %v198, %v326
  %v391 = vsel %vm263, %v199, %v327
  %v392 = vsel %vm264, %v200, %v328
  %v393 = vsel %vm265, %v201, %v329
  %v394 = vsel %vm266, %v202, %v330
  %v395 = vsel %vm267, %v203, %v331
  %v396 = vsel %vm268, %v204, %v332
  %v397 = vsel %vm269, %v205, %v333
  %v398 = vsel %vm270, %v206, %v334
  %v399 = vsel %vm271, %v207, %v335
  %v400 = vsel %vm272, %v208, %v336
  %v401 = vsel %vm273, %v209, %v337
  %v402 = vsel %vm274, %v210, %v338
  %v403 = vsel %vm275, %v211, %v339
  %v404 = vsel %vm276, %v212, %v340
  %v405 = vsel %vm277, %v213, %v341
  %v406 = vsel %vm278, %v214, %v342
  %v407 = vsel %vm279, %v215, %v343
  %v408 = vsel %vm280, %v216, %v344
  %v409 = vsel %vm281, %v217, %v345
  %v410 = vsel %vm282, %v218, %v346
  %v411 = vsel %vm283, %v219, %v347
  %412 = vst [vmem:[%s3] sm:$0xff] %v348
  %413 = vst [vmem:[%s3 + $0x8] sm:$0xff] %v349
  %414 = vst [vmem:[%s3 + $0x10] sm:$0xff] %v350
  %415 = vst [vmem:[%s3 + $0x18] sm:$0xff] %v351
  %416 = vst [vmem:[%s3 + $0x20] sm:$0xff] %v352
  %417 = vst [vmem:[%s3 + $0x28] sm:$0xff] %v353
  %418 = vst [vmem:[%s3 + $0x30] sm:$0xff] %v354
  %419 = vst [vmem:[%s3 + $0x38] sm:$0xff] %v355
  %420 = vst [vmem:[%s3 + $0x40] sm:$0xff] %v356
  %421 = vst [vmem:[%s3 + $0x48] sm:$0xff] %v357
  %422 = vst [vmem:[%s3 + $0x50] sm:$0xff] %v358
  %423 = vst [vmem:[%s3 + $0x58] sm:$0xff] %v359
  %424 = vst [vmem:[%s3 + $0x60] sm:$0xff] %v360
  %425 = vst [vmem:[%s3 + $0x68] sm:$0xff] %v361
  %426 = vst [vmem:[%s3 + $0x70] sm:$0xff] %v362
  %427 = vst [vmem:[%s3 + $0x78] sm:$0xff] %v363
  %428 = vst [vmem:[%s3 + $0x80] sm:$0xff] %v364
  %429 = vst [vmem:[%s3 + $0x88] sm:$0xff] %v365
  %430 = vst [vmem:[%s3 + $0x90] sm:$0xff] %v366
  %431 = vst [vmem:[%s3 + $0x98] sm:$0xff] %v367
  %432 = vst [vmem:[%s3 + $0xa0] sm:$0xff] %v368
  %433 = vst [vmem:[%s3 + $0xa8] sm:$0xff] %v369
  %434 = vst [vmem:[%s3 + $0xb0] sm:$0xff] %v370
  %435 = vst [vmem:[%s3 + $0xb8] sm:$0xff] %v371
  %436 = vst [vmem:[%s3 + $0xc0] sm:$0xff] %v372
  %437 = vst [vmem:[%s3 + $0xc8] sm:$0xff] %v373
  %438 = vst [vmem:[%s3 + $0xd0] sm:$0xff] %v374
  %439 = vst [vmem:[%s3 + $0xd8] sm:$0xff] %v375
  %440 = vst [vmem:[%s3 + $0xe0] sm:$0xff] %v376
  %441 = vst [vmem:[%s3 + $0xe8] sm:$0xff] %v377
  %442 = vst [vmem:[%s3 + $0xf0] sm:$0xff] %v378
  %443 = vst [vmem:[%s3 + $0xf8] sm:$0xff] %v379
  %444 = vst [vmem:[%s3 + $0x100] sm:$0xff] %v380
  %445 = vst [vmem:[%s3 + $0x108] sm:$0xff] %v381
  %446 = vst [vmem:[%s3 + $0x110] sm:$0xff] %v382
  %447 = vst [vmem:[%s3 + $0x118] sm:$0xff] %v383
  %448 = vst [vmem:[%s3 + $0x120] sm:$0xff] %v384
  %449 = vst [vmem:[%s3 + $0x128] sm:$0xff] %v385
  %450 = vst [vmem:[%s3 + $0x130] sm:$0xff] %v386
  %451 = vst [vmem:[%s3 + $0x138] sm:$0xff] %v387
  %452 = vst [vmem:[%s3 + $0x140] sm:$0xff] %v388
  %453 = vst [vmem:[%s3 + $0x148] sm:$0xff] %v389
  %454 = vst [vmem:[%s3 + $0x150] sm:$0xff] %v390
  %455 = vst [vmem:[%s3 + $0x158] sm:$0xff] %v391
  %456 = vst [vmem:[%s3 + $0x160] sm:$0xff] %v392
  %457 = vst [vmem:[%s3 + $0x168] sm:$0xff] %v393
  %458 = vst [vmem:[%s3 + $0x170] sm:$0xff] %v394
  %459 = vst [vmem:[%s3 + $0x178] sm:$0xff] %v395
  %460 = vst [vmem:[%s3 + $0x180] sm:$0xff] %v396
  %461 = vst [vmem:[%s3 + $0x188] sm:$0xff] %v397
  %462 = vst [vmem:[%s3 + $0x190] sm:$0xff] %v398
  %463 = vst [vmem:[%s3 + $0x198] sm:$0xff] %v399
  %464 = vst [vmem:[%s3 + $0x1a0] sm:$0xff] %v400
  %465 = vst [vmem:[%s3 + $0x1a8] sm:$0xff] %v401
  %466 = vst [vmem:[%s3 + $0x1b0] sm:$0xff] %v402
  %467 = vst [vmem:[%s3 + $0x1b8] sm:$0xff] %v403
  %468 = vst [vmem:[%s3 + $0x1c0] sm:$0xff] %v404
  %469 = vst [vmem:[%s3 + $0x1c8] sm:$0xff] %v405
  %470 = vst [vmem:[%s3 + $0x1d0] sm:$0xff] %v406
  %471 = vst [vmem:[%s3 + $0x1d8] sm:$0xff] %v407
  %472 = vst [vmem:[%s3 + $0x1e0] sm:$0xff] %v408
  %473 = vst [vmem:[%s3 + $0x1e8] sm:$0xff] %v409
  %474 = vst [vmem:[%s3 + $0x1f0] sm:$0xff] %v410
  %475 = vst [vmem:[%s3 + $0x1f8] sm:$0xff] %v411
  // Predicated region
  $region14: #{upstream_block_2d_forward.7} parent=0 // pred_check
    _
  $region15: #{upstream_block_2d_forward.7} parent=0 // pred_check_branch
    %477 = sbr.rel (0) target = $region17
  $region16: #{upstream_block_2d_forward.7} parent=0 // pred_region
    _
  $region17: #{upstream_block_2d_forward.7} parent=0 // pred_fallthru
    _
  // Predicated region
  $region18: #{upstream_block_2d_forward.7} parent=0 // pred_check
    _
  $region19: #{upstream_block_2d_forward.7} parent=0 // pred_check_branch
    %479 = sbr.rel (0) target = $region21
  $region20: #{upstream_block_2d_forward.7} parent=0 // pred_region
    _
  $region21: #{upstream_block_2d_forward.7} parent=0 // pred_fallthru
    _

// kernel: upstream_block_2d_forward.6
$region0: #{upstream_block_2d_forward.6}
  #allocation0 [shape = 'u32[]', space=smem, size = 0x4, offset = 0x4, fixed_abs, tag = 'smem constant byte address 0x4 - core index']
  #allocation1 [shape = 'u32[144,128]{1,0:T(1,128)}', space=vmem, size = 0x12000, scoped, tag = 'internal scratch']
  %s0 = inlined_call_operand.vmem [shape: bf16[512,72], index: 0, kind: input, shape index: {}]
  %s1 = inlined_call_operand.vmem [shape: bf16[72,128], index: 1, kind: input, shape index: {}]
  %s2 = inlined_call_operand.vmem [shape: f32[1,128], index: 2, kind: input, shape index: {}]
  %s3 = inlined_call_operand.vmem [shape: f32[512,128], index: 3, kind: output, shape index: {0}]
  %s4 = inlined_call_operand.vmem [shape: f32[1,2,128], index: 4, kind: output, shape index: {1}]
  %5 = xla_tuple %s3, %s4
  %s6 = sld [smem:[#allocation0]]
  $region30: #{upstream_block_2d_forward.6} parent=0
    _
  %s8 = ssub.s32 1, %s6
  %s9 = scalar_select 0, %s8, %s6
  // Predicated region
  $region2: #{upstream_block_2d_forward.6} parent=0 // pred_check
    _
  $region3: #{upstream_block_2d_forward.6} parent=0 // pred_check_branch
    %11 = sbr.rel (0) target = $region5
  $region4: #{upstream_block_2d_forward.6} parent=0 // pred_region
    _
  $region5: #{upstream_block_2d_forward.6} parent=0 // pred_fallthru
    _
  // Predicated region
  $region6: #{upstream_block_2d_forward.6} parent=0 // pred_check
    _
  $region7: #{upstream_block_2d_forward.6} parent=0 // pred_check_branch
    %13 = sbr.rel (0) target = $region9
  $region8: #{upstream_block_2d_forward.6} parent=0 // pred_region
    _
  $region9: #{upstream_block_2d_forward.6} parent=0 // pred_fallthru
    _
  // Predicated region
  $region10: #{upstream_block_2d_forward.6} parent=0 // pred_check
    _
  $region11: #{upstream_block_2d_forward.6} parent=0 // pred_check_branch
    %15 = sbr.rel (0) target = $region13
  $region12: #{upstream_block_2d_forward.6} parent=0 // pred_region
    _
  $region13: #{upstream_block_2d_forward.6} parent=0 // pred_fallthru
    _
  %v17 = vld [vmem:[%s0] sm:$0xf]
  %v18 = vld [vmem:[%s0 + $0x4] sm:$0xf]
  %v19 = vld [vmem:[%s0 + $0x8] sm:$0xf]
  %v20 = vld [vmem:[%s0 + $0xc] sm:$0xf]
  %v21 = vld [vmem:[%s0 + $0x10] sm:$0xf]
  %v22 = vld [vmem:[%s0 + $0x14] sm:$0xf]
  %v23 = vld [vmem:[%s0 + $0x18] sm:$0xf]
  %v24 = vld [vmem:[%s0 + $0x1c] sm:$0xf]
  %v25 = vld [vmem:[%s0 + $0x20] sm:$0xf]
  %v26 = vld [vmem:[%s0 + $0x24] sm:$0xf]
  %v27 = vld [vmem:[%s0 + $0x28] sm:$0xf]
  %v28 = vld [vmem:[%s0 + $0x2c] sm:$0xf]
  %v29 = vld [vmem:[%s0 + $0x30] sm:$0xf]
  %v30 = vld [vmem:[%s0 + $0x34] sm:$0xf]
  %v31 = vld [vmem:[%s0 + $0x38] sm:$0xf]
  %v32 = vld [vmem:[%s0 + $0x3c] sm:$0xf]
  %v33 = vld [vmem:[%s0 + $0x40] sm:$0xf]
  %v34 = vld [vmem:[%s0 + $0x44] sm:$0xf]
  %v35 = vld [vmem:[%s0 + $0x48] sm:$0xf]
  %v36 = vld [vmem:[%s0 + $0x4c] sm:$0xf]
  %v37 = vld [vmem:[%s0 + $0x50] sm:$0xf]
  %v38 = vld [vmem:[%s0 + $0x54] sm:$0xf]
  %v39 = vld [vmem:[%s0 + $0x58] sm:$0xf]
  %v40 = vld [vmem:[%s0 + $0x5c] sm:$0xf]
  %v41 = vld [vmem:[%s0 + $0x60] sm:$0xf]
  %v42 = vld [vmem:[%s0 + $0x64] sm:$0xf]
  %v43 = vld [vmem:[%s0 + $0x68] sm:$0xf]
  %v44 = vld [vmem:[%s0 + $0x6c] sm:$0xf]
  %v45 = vld [vmem:[%s0 + $0x70] sm:$0xf]
  %v46 = vld [vmem:[%s0 + $0x74] sm:$0xf]
  %v47 = vld [vmem:[%s0 + $0x78] sm:$0xf]
  %v48 = vld [vmem:[%s0 + $0x7c] sm:$0xf]
  %v49 = vld [vmem:[%s0 + $0x80] sm:$0xf]
  %v50 = vld [vmem:[%s0 + $0x84] sm:$0xf]
  %v51 = vld [vmem:[%s0 + $0x88] sm:$0xf]
  %v52 = vld [vmem:[%s0 + $0x8c] sm:$0xf]
  %v53 = vld [vmem:[%s0 + $0x90] sm:$0xf]
  %v54 = vld [vmem:[%s0 + $0x94] sm:$0xf]
  %v55 = vld [vmem:[%s0 + $0x98] sm:$0xf]
  %v56 = vld [vmem:[%s0 + $0x9c] sm:$0xf]
  %v57 = vld [vmem:[%s0 + $0xa0] sm:$0xf]
  %v58 = vld [vmem:[%s0 + $0xa4] sm:$0xf]
  %v59 = vld [vmem:[%s0 + $0xa8] sm:$0xf]
  %v60 = vld [vmem:[%s0 + $0xac] sm:$0xf]
  %v61 = vld [vmem:[%s0 + $0xb0] sm:$0xf]
  %v62 = vld [vmem:[%s0 + $0xb4] sm:$0xf]
  %v63 = vld [vmem:[%s0 + $0xb8] sm:$0xf]
  %v64 = vld [vmem:[%s0 + $0xbc] sm:$0xf]
  %v65 = vld [vmem:[%s0 + $0xc0] sm:$0xf]
  %v66 = vld [vmem:[%s0 + $0xc4] sm:$0xf]
  %v67 = vld [vmem:[%s0 + $0xc8] sm:$0xf]
  %v68 = vld [vmem:[%s0 + $0xcc] sm:$0xf]
  %v69 = vld [vmem:[%s0 + $0xd0] sm:$0xf]
  %v70 = vld [vmem:[%s0 + $0xd4] sm:$0xf]
  %v71 = vld [vmem:[%s0 + $0xd8] sm:$0xf]
  %v72 = vld [vmem:[%s0 + $0xdc] sm:$0xf]
  %v73 = vld [vmem:[%s0 + $0xe0] sm:$0xf]
  %v74 = vld [vmem:[%s0 + $0xe4] sm:$0xf]
  %v75 = vld [vmem:[%s0 + $0xe8] sm:$0xf]
  %v76 = vld [vmem:[%s0 + $0xec] sm:$0xf]
  %v77 = vld [vmem:[%s0 + $0xf0] sm:$0xf]
  %v78 = vld [vmem:[%s0 + $0xf4] sm:$0xf]
  %v79 = vld [vmem:[%s0 + $0xf8] sm:$0xf]
  %v80 = vld [vmem:[%s0 + $0xfc] sm:$0xf]
  %v81 = vld [vmem:[%s1] sm:$0xf]
  %v82 = vld [vmem:[%s1 + $0x4] sm:$0xf]
  %v83 = vld [vmem:[%s1 + $0x8] sm:$0xf]
  %v84 = vld [vmem:[%s1 + $0xc] sm:$0xf]
  %v85 = vld [vmem:[%s1 + $0x10] sm:$0xf]
  %v86 = vld [vmem:[%s1 + $0x14] sm:$0xf]
  %v87 = vld [vmem:[%s1 + $0x18] sm:$0xf]
  %v88 = vld [vmem:[%s1 + $0x1c] sm:$0xf]
  %v89 = vld [vmem:[%s1 + $0x20] sm:$0xf]
  %v90 = vld [vmem:[%s2] sm:$0x1]
  %v92 = vlaneseq
  %v93 = vshrl.u32 %v92, 7
  %v94 = vsub.s32 0, %v93
  %v95 = vrot.slane %v90, %v94
  %v161 = vunpack.c.l.b16 %v17
  %v162 = vunpack.c.l.b16 %v18
  %v163 = vunpack.c.l.b16 %v19
  %v164 = vunpack.c.l.b16 %v20
  %v165 = vunpack.c.l.b16 %v21
  %v166 = vunpack.c.l.b16 %v22
  %v167 = vunpack.c.l.b16 %v23
  %v168 = vunpack.c.l.b16 %v24
  %v169 = vunpack.c.l.b16 %v25
  %v170 = vunpack.c.l.b16 %v26
  %v171 = vunpack.c.l.b16 %v27
  %v172 = vunpack.c.l.b16 %v28
  %v173 = vunpack.c.l.b16 %v29
  %v174 = vunpack.c.l.b16 %v30
  %v175 = vunpack.c.l.b16 %v31
  %v176 = vunpack.c.l.b16 %v32
  %v177 = vunpack.c.l.b16 %v33
  %v178 = vunpack.c.l.b16 %v34
  %v179 = vunpack.c.l.b16 %v35
  %v180 = vunpack.c.l.b16 %v36
  %v181 = vunpack.c.l.b16 %v37
  %v182 = vunpack.c.l.b16 %v38
  %v183 = vunpack.c.l.b16 %v39
  %v184 = vunpack.c.l.b16 %v40
  %v185 = vunpack.c.l.b16 %v41
  %v186 = vunpack.c.l.b16 %v42
  %v187 = vunpack.c.l.b16 %v43
  %v188 = vunpack.c.l.b16 %v44
  %v189 = vunpack.c.l.b16 %v45
  %v190 = vunpack.c.l.b16 %v46
  %v191 = vunpack.c.l.b16 %v47
  %v192 = vunpack.c.l.b16 %v48
  %v193 = vunpack.c.l.b16 %v49
  %v194 = vunpack.c.l.b16 %v50
  %v195 = vunpack.c.l.b16 %v51
  %v196 = vunpack.c.l.b16 %v52
  %v197 = vunpack.c.l.b16 %v53
  %v198 = vunpack.c.l.b16 %v54
  %v199 = vunpack.c.l.b16 %v55
  %v200 = vunpack.c.l.b16 %v56
  %v201 = vunpack.c.l.b16 %v57
  %v202 = vunpack.c.l.b16 %v58
  %v203 = vunpack.c.l.b16 %v59
  %v204 = vunpack.c.l.b16 %v60
  %v205 = vunpack.c.l.b16 %v61
  %v206 = vunpack.c.l.b16 %v62
  %v207 = vunpack.c.l.b16 %v63
  %v208 = vunpack.c.l.b16 %v64
  %v209 = vunpack.c.l.b16 %v65
  %v210 = vunpack.c.l.b16 %v66
  %v211 = vunpack.c.l.b16 %v67
  %v212 = vunpack.c.l.b16 %v68
  %v213 = vunpack.c.l.b16 %v69
  %v214 = vunpack.c.l.b16 %v70
  %v215 = vunpack.c.l.b16 %v71
  %v216 = vunpack.c.l.b16 %v72
  %v217 = vunpack.c.l.b16 %v73
  %v218 = vunpack.c.l.b16 %v74
  %v219 = vunpack.c.l.b16 %v75
  %v220 = vunpack.c.l.b16 %v76
  %v221 = vunpack.c.l.b16 %v77
  %v222 = vunpack.c.l.b16 %v78
  %v223 = vunpack.c.l.b16 %v79
  %v224 = vunpack.c.l.b16 %v80
  %v225 = vpack.c.b16 %v162, %v161
  %v226 = vpack.c.b16 %v164, %v163
  %v227 = vpack.c.b16 %v166, %v165
  %v228 = vpack.c.b16 %v168, %v167
  %v229 = vpack.c.b16 %v170, %v169
  %v230 = vpack.c.b16 %v172, %v171
  %v231 = vpack.c.b16 %v174, %v173
  %v232 = vpack.c.b16 %v176, %v175
  %v233 = vpack.c.b16 %v178, %v177
  %v234 = vpack.c.b16 %v180, %v179
  %v235 = vpack.c.b16 %v182, %v181
  %v236 = vpack.c.b16 %v184, %v183
  %v237 = vpack.c.b16 %v186, %v185
  %v238 = vpack.c.b16 %v188, %v187
  %v239 = vpack.c.b16 %v190, %v189
  %v240 = vpack.c.b16 %v192, %v191
  %v241 = vpack.c.b16 %v194, %v193
  %v242 = vpack.c.b16 %v196, %v195
  %v243 = vpack.c.b16 %v198, %v197
  %v244 = vpack.c.b16 %v200, %v199
  %v245 = vpack.c.b16 %v202, %v201
  %v246 = vpack.c.b16 %v204, %v203
  %v247 = vpack.c.b16 %v206, %v205
  %v248 = vpack.c.b16 %v208, %v207
  %v249 = vpack.c.b16 %v210, %v209
  %v250 = vpack.c.b16 %v212, %v211
  %v251 = vpack.c.b16 %v214, %v213
  %v252 = vpack.c.b16 %v216, %v215
  %v253 = vpack.c.b16 %v218, %v217
  %v254 = vpack.c.b16 %v220, %v219
  %v255 = vpack.c.b16 %v222, %v221
  %v256 = vpack.c.b16 %v224, %v223
  %v266 = vunpack.c.l.b16 %v81
  %v267 = vunpack.c.l.b16 %v82
  %v268 = vunpack.c.l.b16 %v83
  %v269 = vunpack.c.l.b16 %v84
  %v270 = vunpack.c.l.b16 %v85
  %v271 = vunpack.c.l.b16 %v86
  %v272 = vunpack.c.l.b16 %v87
  %v273 = vunpack.c.l.b16 %v88
  %v274 = vunpack.c.l.b16 %v89
  %v275 = vpack.c.b16 %v267, %v266
  %v276 = vpack.c.b16 %v269, %v268
  %v277 = vpack.c.b16 %v271, %v270
  %v278 = vpack.c.b16 %v273, %v272
  %v279 = vpack.c.b16 %v274, %v274
  %vm284 = vcmask 588800
  %v286 = vsel %vm284, %v225, 0
  %v289 = vsel %vm284, %v226, 0
  %v292 = vsel %vm284, %v227, 0
  %v295 = vsel %vm284, %v228, 0
  %v298 = vsel %vm284, %v229, 0
  %v301 = vsel %vm284, %v230, 0
  %v304 = vsel %vm284, %v231, 0
  %v307 = vsel %vm284, %v232, 0
  %v310 = vsel %vm284, %v233, 0
  %v313 = vsel %vm284, %v234, 0
  %v316 = vsel %vm284, %v235, 0
  %v319 = vsel %vm284, %v236, 0
  %v322 = vsel %vm284, %v237, 0
  %v325 = vsel %vm284, %v238, 0
  %v328 = vsel %vm284, %v239, 0
  %v331 = vsel %vm284, %v240, 0
  %v334 = vsel %vm284, %v241, 0
  %v337 = vsel %vm284, %v242, 0
  %v340 = vsel %vm284, %v243, 0
  %v343 = vsel %vm284, %v244, 0
  %v346 = vsel %vm284, %v245, 0
  %v349 = vsel %vm284, %v246, 0
  %v352 = vsel %vm284, %v247, 0
  %v355 = vsel %vm284, %v248, 0
  %v358 = vsel %vm284, %v249, 0
  %v361 = vsel %vm284, %v250, 0
  %v364 = vsel %vm284, %v251, 0
  %v367 = vsel %vm284, %v252, 0
  %v370 = vsel %vm284, %v253, 0
  %v373 = vsel %vm284, %v254, 0
  %v376 = vsel %vm284, %v255, 0
  %v379 = vsel %vm284, %v256, 0
  %vm381 = vcmask 1043456
  %v383 = vsel %vm381, %v279, 0
  %385 = vmatprep.subr.bf16.mxu0 0
  %386 = vmatpush1.bf16.msra.mxu0 %v275
  %387 = vmatprep.subr.bf16.mxu0 0
  %388 = vmatpush1.bf16.msra.mxu0 %v276
  %389 = vmatprep.subr.bf16.mxu0 0
  %390 = vmatpush1.bf16.msra.mxu0 %v277
  %391 = vmatprep.subr.bf16.mxu0 0
  %392 = vmatpush1.bf16.msra.mxu0 %v278
  %393 = vmatprep.subr.bf16.mxu0 0
  %394 = vmatpush1.bf16.msra.mxu0 %v383
  %395 = vmatprep.subr.bf16.mxu0 0
  %396 = vmatpush1.bf16.msra.mxu0 0
  %397 = vmatprep.subr.bf16.mxu0 0
  %398 = vmatpush1.bf16.msra.mxu0 0
  %399 = vmatprep.subr.bf16.mxu0 0
  %400 = vmatpush1.bf16.msra.mxu0 0
  %401 = vmatprep.subr.bf16.mxu0 0
  %402 = vmatpush1.bf16.msra.mxu0 0
  %403 = vmatprep.subr.bf16.mxu0 0
  %404 = vmatpush1.bf16.msra.mxu0 0
  %405 = vmatprep.subr.bf16.mxu0 0
  %406 = vmatpush1.bf16.msra.mxu0 0
  %407 = vmatprep.subr.bf16.mxu0 0
  %408 = vmatpush1.bf16.msra.mxu0 0
  %409 = vmatprep.subr.bf16.mxu0 0
  %410 = vmatpush1.bf16.msra.mxu0 0
  %411 = vmatprep.subr.bf16.mxu0 0
  %412 = vmatpush1.bf16.msra.mxu0 0
  %413 = vmatprep.subr.bf16.mxu0 0
  %414 = vmatpush1.bf16.msra.mxu0 0
  %415 = vmatprep.subr.bf16.mxu0 0
  %416 = vmatpush1.bf16.msra.mxu0 0
  %417 = vmatprep.mubr.bf16.mxu0 0
  %418 = vmatmul.mubr.bf16.gmra.mrb[0].mxu0 %v286
  %v419 = vpop.f32.mrb[0].mxu0
  %v420 = vadd.f32 %v95, %v419
  %v421 = vpop.f32.mrb[0].mxu0
  %v422 = vpop.f32.mrb[0].mxu0
  %v423 = vadd.f32 %v95, %v422
  %v424 = vpop.f32.mrb[0].mxu0
  %425 = vmatprep.mubr.bf16.mxu0 0
  %426 = vmatmul.mubr.bf16.gmra.mrb[0].mxu0 %v289
  %v427 = vpop.f32.mrb[0].mxu0
  %v428 = vadd.f32 %v95, %v427
  %v429 = vpop.f32.mrb[0].mxu0
  %v430 = vpop.f32.mrb[0].mxu0
  %v431 = vadd.f32 %v95, %v430
  %v432 = vpop.f32.mrb[0].mxu0
  %433 = vmatprep.mubr.bf16.mxu0 0
  %434 = vmatmul.mubr.bf16.gmra.mrb[0].mxu0 %v292
  %v435 = vpop.f32.mrb[0].mxu0
  %v436 = vadd.f32 %v95, %v435
  %v437 = vpop.f32.mrb[0].mxu0
  %v438 = vpop.f32.mrb[0].mxu0
  %v439 = vadd.f32 %v95, %v438
  %v440 = vpop.f32.mrb[0].mxu0
  %441 = vmatprep.mubr.bf16.mxu0 0
  %442 = vmatmul.mubr.bf16.gmra.mrb[0].mxu0 %v295
  %v443 = vpop.f32.mrb[0].mxu0
  %v444 = vadd.f32 %v95, %v443
  %v445 = vpop.f32.mrb[0].mxu0
  %v446 = vpop.f32.mrb[0].mxu0
  %v447 = vadd.f32 %v95, %v446
  %v448 = vpop.f32.mrb[0].mxu0
  %449 = vmatprep.mubr.bf16.mxu0 0
  %450 = vmatmul.mubr.bf16.gmra.mrb[0].mxu0 %v298
  %v451 = vpop.f32.mrb[0].mxu0
  %v452 = vadd.f32 %v95, %v451
  %v453 = vpop.f32.mrb[0].mxu0
  %v454 = vpop.f32.mrb[0].mxu0
  %v455 = vadd.f32 %v95, %v454
  %v456 = vpop.f32.mrb[0].mxu0
  %457 = vmatprep.mubr.bf16.mxu0 0
  %458 = vmatmul.mubr.bf16.gmra.mrb[0].mxu0 %v301
  %v459 = vpop.f32.mrb[0].mxu0
  %v460 = vadd.f32 %v95, %v459
  %v461 = vpop.f32.mrb[0].mxu0
  %v462 = vpop.f32.mrb[0].mxu0
  %v463 = vadd.f32 %v95, %v462
  %v464 = vpop.f32.mrb[0].mxu0
  %465 = vmatprep.mubr.bf16.mxu0 0
  %466 = vmatmul.mubr.bf16.gmra.mrb[0].mxu0 %v304
  %v467 = vpop.f32.mrb[0].mxu0
  %v468 = vadd.f32 %v95, %v467
  %v469 = vpop.f32.mrb[0].mxu0
  %v470 = vpop.f32.mrb[0].mxu0
  %v471 = vadd.f32 %v95, %v470
  %v472 = vpop.f32.mrb[0].mxu0
  %473 = vmatprep.mubr.bf16.mxu0 0
  %474 = vmatmul.mubr.bf16.gmra.mrb[0].mxu0 %v307
  %v475 = vpop.f32.mrb[0].mxu0
  %v476 = vadd.f32 %v95, %v475
  %v477 = vpop.f32.mrb[0].mxu0
  %v478 = vpop.f32.mrb[0].mxu0
  %v479 = vadd.f32 %v95, %v478
  %v480 = vpop.f32.mrb[0].mxu0
  %481 = vmatprep.mubr.bf16.mxu0 0
  %482 = vmatmul.mubr.bf16.gmra.mrb[0].mxu0 %v310
  %v483 = vpop.f32.mrb[0].mxu0
  %v484 = vadd.f32 %v95, %v483
  %v485 = vpop.f32.mrb[0].mxu0
  %v486 = vpop.f32.mrb[0].mxu0
  %v487 = vadd.f32 %v95, %v486
  %v488 = vpop.f32.mrb[0].mxu0
  %489 = vmatprep.mubr.bf16.mxu0 0
  %490 = vmatmul.mubr.bf16.gmra.mrb[0].mxu0 %v313
  %v491 = vpop.f32.mrb[0].mxu0
  %v492 = vadd.f32 %v95, %v491
  %v493 = vpop.f32.mrb[0].mxu0
  %v494 = vpop.f32.mrb[0].mxu0
  %v495 = vadd.f32 %v95, %v494
  %v496 = vpop.f32.mrb[0].mxu0
  %497 = vmatprep.mubr.bf16.mxu0 0
  %498 = vmatmul.mubr.bf16.gmra.mrb[0].mxu0 %v316
  %v499 = vpop.f32.mrb[0].mxu0
  %v500 = vadd.f32 %v95, %v499
  %v501 = vpop.f32.mrb[0].mxu0
  %v502 = vpop.f32.mrb[0].mxu0
  %v503 = vadd.f32 %v95, %v502
  %v504 = vpop.f32.mrb[0].mxu0
  %505 = vmatprep.mubr.bf16.mxu0 0
  %506 = vmatmul.mubr.bf16.gmra.mrb[0].mxu0 %v319
  %v507 = vpop.f32.mrb[0].mxu0
  %v508 = vadd.f32 %v95, %v507
  %v509 = vpop.f32.mrb[0].mxu0
  %v510 = vpop.f32.mrb[0].mxu0
  %v511 = vadd.f32 %v95, %v510
  %v512 = vpop.f32.mrb[0].mxu0
  %513 = vmatprep.mubr.bf16.mxu0 0
  %514 = vmatmul.mubr.bf16.gmra.mrb[0].mxu0 %v322
  %v515 = vpop.f32.mrb[0].mxu0
  %v516 = vadd.f32 %v95, %v515
  %v517 = vpop.f32.mrb[0].mxu0
  %v518 = vpop.f32.mrb[0].mxu0
  %v519 = vadd.f32 %v95, %v518
  %v520 = vpop.f32.mrb[0].mxu0
  %521 = vmatprep.mubr.bf16.mxu0 0
  %522 = vmatmul.mubr.bf16.gmra.mrb[0].mxu0 %v325
  %v523 = vpop.f32.mrb[0].mxu0
  %v524 = vadd.f32 %v95, %v523
  %v525 = vpop.f32.mrb[0].mxu0
  %v526 = vpop.f32.mrb[0].mxu0
  %v527 = vadd.f32 %v95, %v526
  %v528 = vpop.f32.mrb[0].mxu0
  %529 = vmatprep.mubr.bf16.mxu0 0
  %530 = vmatmul.mubr.bf16.gmra.mrb[0].mxu0 %v328
  %v531 = vpop.f32.mrb[0].mxu0
  %v532 = vadd.f32 %v95, %v531
  %v533 = vpop.f32.mrb[0].mxu0
  %v534 = vpop.f32.mrb[0].mxu0
  %v535 = vadd.f32 %v95, %v534
  %v536 = vpop.f32.mrb[0].mxu0
  %537 = vmatprep.mubr.bf16.mxu0 0
  %538 = vmatmul.mubr.bf16.gmra.mrb[0].mxu0 %v331
  %v539 = vpop.f32.mrb[0].mxu0
  %v540 = vadd.f32 %v95, %v539
  %v541 = vpop.f32.mrb[0].mxu0
  %v542 = vpop.f32.mrb[0].mxu0
  %v543 = vadd.f32 %v95, %v542
  %v544 = vpop.f32.mrb[0].mxu0
  %545 = vmatprep.mubr.bf16.mxu0 0
  %546 = vmatmul.mubr.bf16.gmra.mrb[0].mxu0 %v334
  %v547 = vpop.f32.mrb[0].mxu0
  %v548 = vadd.f32 %v95, %v547
  %v549 = vpop.f32.mrb[0].mxu0
  %v550 = vpop.f32.mrb[0].mxu0
  %v551 = vadd.f32 %v95, %v550
  %v552 = vpop.f32.mrb[0].mxu0
  %553 = vmatprep.mubr.bf16.mxu0 0
  %554 = vmatmul.mubr.bf16.gmra.mrb[0].mxu0 %v337
  %v555 = vpop.f32.mrb[0].mxu0
  %v556 = vadd.f32 %v95, %v555
  %v557 = vpop.f32.mrb[0].mxu0
  %v558 = vpop.f32.mrb[0].mxu0
  %v559 = vadd.f32 %v95, %v558
  %v560 = vpop.f32.mrb[0].mxu0
  %561 = vmatprep.mubr.bf16.mxu0 0
  %562 = vmatmul.mubr.bf16.gmra.mrb[0].mxu0 %v340
  %v563 = vpop.f32.mrb[0].mxu0
  %v564 = vadd.f32 %v95, %v563
  %v565 = vpop.f32.mrb[0].mxu0
  %v566 = vpop.f32.mrb[0].mxu0
  %v567 = vadd.f32 %v95, %v566
  %v568 = vpop.f32.mrb[0].mxu0
  %569 = vmatprep.mubr.bf16.mxu0 0
  %570 = vmatmul.mubr.bf16.gmra.mrb[0].mxu0 %v343
  %v571 = vpop.f32.mrb[0].mxu0
  %v572 = vadd.f32 %v95, %v571
  %v573 = vpop.f32.mrb[0].mxu0
  %v574 = vpop.f32.mrb[0].mxu0
  %v575 = vadd.f32 %v95, %v574
  %v576 = vpop.f32.mrb[0].mxu0
  %577 = vmatprep.mubr.bf16.mxu0 0
  %578 = vmatmul.mubr.bf16.gmra.mrb[0].mxu0 %v346
  %v579 = vpop.f32.mrb[0].mxu0
  %v580 = vadd.f32 %v95, %v579
  %v581 = vpop.f32.mrb[0].mxu0
  %v582 = vpop.f32.mrb[0].mxu0
  %v583 = vadd.f32 %v95, %v582
  %v584 = vpop.f32.mrb[0].mxu0
  %585 = vmatprep.mubr.bf16.mxu0 0
  %586 = vmatmul.mubr.bf16.gmra.mrb[0].mxu0 %v349
  %v587 = vpop.f32.mrb[0].mxu0
  %v588 = vadd.f32 %v95, %v587
  %v589 = vpop.f32.mrb[0].mxu0
  %v590 = vpop.f32.mrb[0].mxu0
  %v591 = vadd.f32 %v95, %v590
  %v592 = vpop.f32.mrb[0].mxu0
  %593 = vmatprep.mubr.bf16.mxu0 0
  %594 = vmatmul.mubr.bf16.gmra.mrb[0].mxu0 %v352
  %v595 = vpop.f32.mrb[0].mxu0
  %v596 = vadd.f32 %v95, %v595
  %v597 = vpop.f32.mrb[0].mxu0
  %v598 = vpop.f32.mrb[0].mxu0
  %v599 = vadd.f32 %v95, %v598
  %v600 = vpop.f32.mrb[0].mxu0
  %601 = vmatprep.mubr.bf16.mxu0 0
  %602 = vmatmul.mubr.bf16.gmra.mrb[0].mxu0 %v355
  %v603 = vpop.f32.mrb[0].mxu0
  %v604 = vadd.f32 %v95, %v603
  %v605 = vpop.f32.mrb[0].mxu0
  %v606 = vpop.f32.mrb[0].mxu0
  %v607 = vadd.f32 %v95, %v606
  %v608 = vpop.f32.mrb[0].mxu0
  %609 = vmatprep.mubr.bf16.mxu0 0
  %610 = vmatmul.mubr.bf16.gmra.mrb[0].mxu0 %v358
  %v611 = vpop.f32.mrb[0].mxu0
  %v612 = vadd.f32 %v95, %v611
  %v613 = vpop.f32.mrb[0].mxu0
  %v614 = vpop.f32.mrb[0].mxu0
  %v615 = vadd.f32 %v95, %v614
  %v616 = vpop.f32.mrb[0].mxu0
  %617 = vmatprep.mubr.bf16.mxu0 0
  %618 = vmatmul.mubr.bf16.gmra.mrb[0].mxu0 %v361
  %v619 = vpop.f32.mrb[0].mxu0
  %v620 = vadd.f32 %v95, %v619
  %v621 = vpop.f32.mrb[0].mxu0
  %v622 = vpop.f32.mrb[0].mxu0
  %v623 = vadd.f32 %v95, %v622
  %v624 = vpop.f32.mrb[0].mxu0
  %625 = vmatprep.mubr.bf16.mxu0 0
  %626 = vmatmul.mubr.bf16.gmra.mrb[0].mxu0 %v364
  %v627 = vpop.f32.mrb[0].mxu0
  %v628 = vadd.f32 %v95, %v627
  %v629 = vpop.f32.mrb[0].mxu0
  %v630 = vpop.f32.mrb[0].mxu0
  %v631 = vadd.f32 %v95, %v630
  %v632 = vpop.f32.mrb[0].mxu0
  %633 = vmatprep.mubr.bf16.mxu0 0
  %634 = vmatmul.mubr.bf16.gmra.mrb[0].mxu0 %v367
  %v635 = vpop.f32.mrb[0].mxu0
  %v636 = vadd.f32 %v95, %v635
  %v637 = vpop.f32.mrb[0].mxu0
  %v638 = vpop.f32.mrb[0].mxu0
  %v639 = vadd.f32 %v95, %v638
  %v640 = vpop.f32.mrb[0].mxu0
  %641 = vmatprep.mubr.bf16.mxu0 0
  %642 = vmatmul.mubr.bf16.gmra.mrb[0].mxu0 %v370
  %v643 = vpop.f32.mrb[0].mxu0
  %v644 = vadd.f32 %v95, %v643
  %v645 = vpop.f32.mrb[0].mxu0
  %v646 = vpop.f32.mrb[0].mxu0
  %v647 = vadd.f32 %v95, %v646
  %v648 = vpop.f32.mrb[0].mxu0
  %649 = vmatprep.mubr.bf16.mxu0 0
  %650 = vmatmul.mubr.bf16.gmra.mrb[0].mxu0 %v373
  %v651 = vpop.f32.mrb[0].mxu0
  %v652 = vadd.f32 %v95, %v651
  %v653 = vpop.f32.mrb[0].mxu0
  %v654 = vpop.f32.mrb[0].mxu0
  %v655 = vadd.f32 %v95, %v654
  %v656 = vpop.f32.mrb[0].mxu0
  %657 = vmatprep.mubr.bf16.mxu0 0
  %658 = vmatmul.mubr.bf16.gmra.mrb[0].mxu0 %v376
  %v659 = vpop.f32.mrb[0].mxu0
  %v660 = vadd.f32 %v95, %v659
  %v661 = vpop.f32.mrb[0].mxu0
  %v662 = vpop.f32.mrb[0].mxu0
  %v663 = vadd.f32 %v95, %v662
  %v664 = vpop.f32.mrb[0].mxu0
  %665 = vmatprep.mubr.bf16.mxu0 0
  %666 = vmatmul.mubr.bf16.gmra.mrb[0].mxu0 %v379
  %v667 = vpop.f32.mrb[0].mxu0
  %v668 = vadd.f32 %v95, %v667
  %v669 = vpop.f32.mrb[0].mxu0
  %v670 = vpop.f32.mrb[0].mxu0
  %v671 = vadd.f32 %v95, %v670
  %v672 = vpop.f32.mrb[0].mxu0
  %673 = vdwg.mxu0
  %674 = vst [vmem:[%s3] sm:$0xff] %v420
  %675 = vst [vmem:[%s3 + $0x8] sm:$0xff] %v423
  %676 = vst [vmem:[%s3 + $0x10] sm:$0xff] %v428
  %677 = vst [vmem:[%s3 + $0x18] sm:$0xff] %v431
  %678 = vst [vmem:[%s3 + $0x20] sm:$0xff] %v436
  %679 = vst [vmem:[%s3 + $0x28] sm:$0xff] %v439
  %680 = vst [vmem:[%s3 + $0x30] sm:$0xff] %v444
  %681 = vst [vmem:[%s3 + $0x38] sm:$0xff] %v447
  %682 = vst [vmem:[%s3 + $0x40] sm:$0xff] %v452
  %683 = vst [vmem:[%s3 + $0x48] sm:$0xff] %v455
  %684 = vst [vmem:[%s3 + $0x50] sm:$0xff] %v460
  %685 = vst [vmem:[%s3 + $0x58] sm:$0xff] %v463
  %686 = vst [vmem:[%s3 + $0x60] sm:$0xff] %v468
  %687 = vst [vmem:[%s3 + $0x68] sm:$0xff] %v471
  %688 = vst [vmem:[%s3 + $0x70] sm:$0xff] %v476
  %689 = vst [vmem:[%s3 + $0x78] sm:$0xff] %v479
  %690 = vst [vmem:[%s3 + $0x80] sm:$0xff] %v484
  %691 = vst [vmem:[%s3 + $0x88] sm:$0xff] %v487
  %692 = vst [vmem:[%s3 + $0x90] sm:$0xff] %v492
  %693 = vst [vmem:[%s3 + $0x98] sm:$0xff] %v495
  %694 = vst [vmem:[%s3 + $0xa0] sm:$0xff] %v500
  %695 = vst [vmem:[%s3 + $0xa8] sm:$0xff] %v503
  %696 = vst [vmem:[%s3 + $0xb0] sm:$0xff] %v508
  %697 = vst [vmem:[%s3 + $0xb8] sm:$0xff] %v511
  %698 = vst [vmem:[%s3 + $0xc0] sm:$0xff] %v516
  %699 = vst [vmem:[%s3 + $0xc8] sm:$0xff] %v519
  %700 = vst [vmem:[%s3 + $0xd0] sm:$0xff] %v524
  %701 = vst [vmem:[%s3 + $0xd8] sm:$0xff] %v527
  %702 = vst [vmem:[%s3 + $0xe0] sm:$0xff] %v532
  %703 = vst [vmem:[%s3 + $0xe8] sm:$0xff] %v535
  %704 = vst [vmem:[%s3 + $0xf0] sm:$0xff] %v540
  %705 = vst [vmem:[%s3 + $0xf8] sm:$0xff] %v543
  %706 = vst [vmem:[%s3 + $0x100] sm:$0xff] %v548
  %707 = vst [vmem:[%s3 + $0x108] sm:$0xff] %v551
  %708 = vst [vmem:[%s3 + $0x110] sm:$0xff] %v556
  %709 = vst [vmem:[%s3 + $0x118] sm:$0xff] %v559
  %710 = vst [vmem:[%s3 + $0x120] sm:$0xff] %v564
  %711 = vst [vmem:[%s3 + $0x128] sm:$0xff] %v567
  %712 = vst [vmem:[%s3 + $0x130] sm:$0xff] %v572
  %713 = vst [vmem:[%s3 + $0x138] sm:$0xff] %v575
  %714 = vst [vmem:[%s3 + $0x140] sm:$0xff] %v580
  %715 = vst [vmem:[%s3 + $0x148] sm:$0xff] %v583
  %716 = vst [vmem:[%s3 + $0x150] sm:$0xff] %v588
  %717 = vst [vmem:[%s3 + $0x158] sm:$0xff] %v591
  %718 = vst [vmem:[%s3 + $0x160] sm:$0xff] %v596
  %719 = vst [vmem:[%s3 + $0x168] sm:$0xff] %v599
  %720 = vst [vmem:[%s3 + $0x170] sm:$0xff] %v604
  %721 = vst [vmem:[%s3 + $0x178] sm:$0xff] %v607
  %722 = vst [vmem:[%s3 + $0x180] sm:$0xff] %v612
  %723 = vst [vmem:[%s3 + $0x188] sm:$0xff] %v615
  %724 = vst [vmem:[%s3 + $0x190] sm:$0xff] %v620
  %725 = vst [vmem:[%s3 + $0x198] sm:$0xff] %v623
  %726 = vst [vmem:[%s3 + $0x1a0] sm:$0xff] %v628
  %727 = vst [vmem:[%s3 + $0x1a8] sm:$0xff] %v631
  %728 = vst [vmem:[%s3 + $0x1b0] sm:$0xff] %v636
  %729 = vst [vmem:[%s3 + $0x1b8] sm:$0xff] %v639
  %730 = vst [vmem:[%s3 + $0x1c0] sm:$0xff] %v644
  %731 = vst [vmem:[%s3 + $0x1c8] sm:$0xff] %v647
  %732 = vst [vmem:[%s3 + $0x1d0] sm:$0xff] %v652
  %733 = vst [vmem:[%s3 + $0x1d8] sm:$0xff] %v655
  %734 = vst [vmem:[%s3 + $0x1e0] sm:$0xff] %v660
  %735 = vst [vmem:[%s3 + $0x1e8] sm:$0xff] %v663
  %736 = vst [vmem:[%s3 + $0x1f0] sm:$0xff] %v668
  %737 = vst [vmem:[%s3 + $0x1f8] sm:$0xff] %v671
  %s738 = smul.u32 0, 512
  %v739 = vlaneseq
  %v740 = vshrl.u32 %v739, 7
  %v741 = vadd.s32 %v740, 8
  %v742 = vadd.s32 %v740, 16
  %v743 = vadd.s32 %v740, 24
  %v744 = vadd.s32 %v740, 32
  %v745 = vadd.s32 %v740, 40
  %v746 = vadd.s32 %v740, 48
  %v747 = vadd.s32 %v740, 56
  %v748 = vadd.s32 %v740, 64
  %v749 = vadd.s32 %v740, 72
  %v750 = vadd.s32 %v740, 80
  %v751 = vadd.s32 %v740, 88
  %v752 = vadd.s32 %v740, 96
  %v753 = vadd.s32 %v740, 104
  %v754 = vadd.s32 %v740, 112
  %v755 = vadd.s32 %v740, 120
  %v756 = vadd.s32 %v740, 128
  %v757 = vadd.s32 %v740, 136
  %v758 = vadd.s32 %v740, 144
  %v759 = vadd.s32 %v740, 152
  %v760 = vadd.s32 %v740, 160
  %v761 = vadd.s32 %v740, 168
  %v762 = vadd.s32 %v740, 176
  %v763 = vadd.s32 %v740, 184
  %v764 = vadd.s32 %v740, 192
  %v765 = vadd.s32 %v740, 200
  %v766 = vadd.s32 %v740, 208
  %v767 = vadd.s32 %v740, 216
  %v768 = vadd.s32 %v740, 224
  %v769 = vadd.s32 %v740, 232
  %v770 = vadd.s32 %v740, 240
  %v771 = vadd.s32 %v740, 248
  %v772 = vadd.s32 %v740, 256
  %v773 = vadd.s32 %v740, 264
  %v774 = vadd.s32 %v740, 272
  %v775 = vadd.s32 %v740, 280
  %v776 = vadd.s32 %v740, 288
  %v777 = vadd.s32 %v740, 296
  %v778 = vadd.s32 %v740, 304
  %v779 = vadd.s32 %v740, 312
  %v780 = vadd.s32 %v740, 320
  %v781 = vadd.s32 %v740, 328
  %v782 = vadd.s32 %v740, 336
  %v783 = vadd.s32 %v740, 344
  %v784 = vadd.s32 %v740, 352
  %v785 = vadd.s32 %v740, 360
  %v786 = vadd.s32 %v740, 368
  %v787 = vadd.s32 %v740, 376
  %v788 = vadd.s32 %v740, 384
  %v789 = vadd.s32 %v740, 392
  %v790 = vadd.s32 %v740, 400
  %v791 = vadd.s32 %v740, 408
  %v792 = vadd.s32 %v740, 416
  %v793 = vadd.s32 %v740, 424
  %v794 = vadd.s32 %v740, 432
  %v795 = vadd.s32 %v740, 440
  %v796 = vadd.s32 %v740, 448
  %v797 = vadd.s32 %v740, 456
  %v798 = vadd.s32 %v740, 464
  %v799 = vadd.s32 %v740, 472
  %v800 = vadd.s32 %v740, 480
  %v801 = vadd.s32 %v740, 488
  %v802 = vadd.s32 %v740, 496
  %v803 = vadd.s32 %v740, 504
  %v804 = vstv %s738
  %v805 = vadd.s32 %v804, %v740
  %v806 = vadd.s32 %v804, %v741
  %v807 = vadd.s32 %v804, %v742
  %v808 = vadd.s32 %v804, %v743
  %v809 = vadd.s32 %v804, %v744
  %v810 = vadd.s32 %v804, %v745
  %v811 = vadd.s32 %v804, %v746
  %v812 = vadd.s32 %v804, %v747
  %v813 = vadd.s32 %v804, %v748
  %v814 = vadd.s32 %v804, %v749
  %v815 = vadd.s32 %v804, %v750
  %v816 = vadd.s32 %v804, %v751
  %v817 = vadd.s32 %v804, %v752
  %v818 = vadd.s32 %v804, %v753
  %v819 = vadd.s32 %v804, %v754
  %v820 = vadd.s32 %v804, %v755
  %v821 = vadd.s32 %v804, %v756
  %v822 = vadd.s32 %v804, %v757
  %v823 = vadd.s32 %v804, %v758
  %v824 = vadd.s32 %v804, %v759
  %v825 = vadd.s32 %v804, %v760
  %v826 = vadd.s32 %v804, %v761
  %v827 = vadd.s32 %v804, %v762
  %v828 = vadd.s32 %v804, %v763
  %v829 = vadd.s32 %v804, %v764
  %v830 = vadd.s32 %v804, %v765
  %v831 = vadd.s32 %v804, %v766
  %v832 = vadd.s32 %v804, %v767
  %v833 = vadd.s32 %v804, %v768
  %v834 = vadd.s32 %v804, %v769
  %v835 = vadd.s32 %v804, %v770
  %v836 = vadd.s32 %v804, %v771
  %v837 = vadd.s32 %v804, %v772
  %v838 = vadd.s32 %v804, %v773
  %v839 = vadd.s32 %v804, %v774
  %v840 = vadd.s32 %v804, %v775
  %v841 = vadd.s32 %v804, %v776
  %v842 = vadd.s32 %v804, %v777
  %v843 = vadd.s32 %v804, %v778
  %v844 = vadd.s32 %v804, %v779
  %v845 = vadd.s32 %v804, %v780
  %v846 = vadd.s32 %v804, %v781
  %v847 = vadd.s32 %v804, %v782
  %v848 = vadd.s32 %v804, %v783
  %v849 = vadd.s32 %v804, %v784
  %v850 = vadd.s32 %v804, %v785
  %v851 = vadd.s32 %v804, %v786
  %v852 = vadd.s32 %v804, %v787
  %v853 = vadd.s32 %v804, %v788
  %v854 = vadd.s32 %v804, %v789
  %v855 = vadd.s32 %v804, %v790
  %v856 = vadd.s32 %v804, %v791
  %v857 = vadd.s32 %v804, %v792
  %v858 = vadd.s32 %v804, %v793
  %v859 = vadd.s32 %v804, %v794
  %v860 = vadd.s32 %v804, %v795
  %v861 = vadd.s32 %v804, %v796
  %v862 = vadd.s32 %v804, %v797
  %v863 = vadd.s32 %v804, %v798
  %v864 = vadd.s32 %v804, %v799
  %v865 = vadd.s32 %v804, %v800
  %v866 = vadd.s32 %v804, %v801
  %v867 = vadd.s32 %v804, %v802
  %v868 = vadd.s32 %v804, %v803
  %vm869 = vcmp.lt.s32.totalorder %v805, 512
  %vm870 = vcmp.lt.s32.totalorder %v806, 512
  %vm871 = vcmp.lt.s32.totalorder %v807, 512
  %vm872 = vcmp.lt.s32.totalorder %v808, 512
  %vm873 = vcmp.lt.s32.totalorder %v809, 512
  %vm874 = vcmp.lt.s32.totalorder %v810, 512
  %vm875 = vcmp.lt.s32.totalorder %v811, 512
  %vm876 = vcmp.lt.s32.totalorder %v812, 512
  %vm877 = vcmp.lt.s32.totalorder %v813, 512
  %vm878 = vcmp.lt.s32.totalorder %v814, 512
  %vm879 = vcmp.lt.s32.totalorder %v815, 512
  %vm880 = vcmp.lt.s32.totalorder %v816, 512
  %vm881 = vcmp.lt.s32.totalorder %v817, 512
  %vm882 = vcmp.lt.s32.totalorder %v818, 512
  %vm883 = vcmp.lt.s32.totalorder %v819, 512
  %vm884 = vcmp.lt.s32.totalorder %v820, 512
  %vm885 = vcmp.lt.s32.totalorder %v821, 512
  %vm886 = vcmp.lt.s32.totalorder %v822, 512
  %vm887 = vcmp.lt.s32.totalorder %v823, 512
  %vm888 = vcmp.lt.s32.totalorder %v824, 512
  %vm889 = vcmp.lt.s32.totalorder %v825, 512
  %vm890 = vcmp.lt.s32.totalorder %v826, 512
  %vm891 = vcmp.lt.s32.totalorder %v827, 512
  %vm892 = vcmp.lt.s32.totalorder %v828, 512
  %vm893 = vcmp.lt.s32.totalorder %v829, 512
  %vm894 = vcmp.lt.s32.totalorder %v830, 512
  %vm895 = vcmp.lt.s32.totalorder %v831, 512
  %vm896 = vcmp.lt.s32.totalorder %v832, 512
  %vm897 = vcmp.lt.s32.totalorder %v833, 512
  %vm898 = vcmp.lt.s32.totalorder %v834, 512
  %vm899 = vcmp.lt.s32.totalorder %v835, 512
  %vm900 = vcmp.lt.s32.totalorder %v836, 512
  %vm901 = vcmp.lt.s32.totalorder %v837, 512
  %vm902 = vcmp.lt.s32.totalorder %v838, 512
  %vm903 = vcmp.lt.s32.totalorder %v839, 512
  %vm904 = vcmp.lt.s32.totalorder %v840, 512
  %vm905 = vcmp.lt.s32.totalorder %v841, 512
  %vm906 = vcmp.lt.s32.totalorder %v842, 512
  %vm907 = vcmp.lt.s32.totalorder %v843, 512
  %vm908 = vcmp.lt.s32.totalorder %v844, 512
  %vm909 = vcmp.lt.s32.totalorder %v845, 512
  %vm910 = vcmp.lt.s32.totalorder %v846, 512
  %vm911 = vcmp.lt.s32.totalorder %v847, 512
  %vm912 = vcmp.lt.s32.totalorder %v848, 512
  %vm913 = vcmp.lt.s32.totalorder %v849, 512
  %vm914 = vcmp.lt.s32.totalorder %v850, 512
  %vm915 = vcmp.lt.s32.totalorder %v851, 512
  %vm916 = vcmp.lt.s32.totalorder %v852, 512
  %vm917 = vcmp.lt.s32.totalorder %v853, 512
  %vm918 = vcmp.lt.s32.totalorder %v854, 512
  %vm919 = vcmp.lt.s32.totalorder %v855, 512
  %vm920 = vcmp.lt.s32.totalorder %v856, 512
  %vm921 = vcmp.lt.s32.totalorder %v857, 512
  %vm922 = vcmp.lt.s32.totalorder %v858, 512
  %vm923 = vcmp.lt.s32.totalorder %v859, 512
  %vm924 = vcmp.lt.s32.totalorder %v860, 512
  %vm925 = vcmp.lt.s32.totalorder %v861, 512
  %vm926 = vcmp.lt.s32.totalorder %v862, 512
  %vm927 = vcmp.lt.s32.totalorder %v863, 512
  %vm928 = vcmp.lt.s32.totalorder %v864, 512
  %vm929 = vcmp.lt.s32.totalorder %v865, 512
  %vm930 = vcmp.lt.s32.totalorder %v866, 512
  %vm931 = vcmp.lt.s32.totalorder %v867, 512
  %vm932 = vcmp.lt.s32.totalorder %v868, 512
  %v933 = vsel %vm869, 1, 0
  %v934 = vsel %vm870, 1, 0
  %v935 = vsel %vm871, 1, 0
  %v936 = vsel %vm872, 1, 0
  %v937 = vsel %vm873, 1, 0
  %v938 = vsel %vm874, 1, 0
  %v939 = vsel %vm875, 1, 0
  %v940 = vsel %vm876, 1, 0
  %v941 = vsel %vm877, 1, 0
  %v942 = vsel %vm878, 1, 0
  %v943 = vsel %vm879, 1, 0
  %v944 = vsel %vm880, 1, 0
  %v945 = vsel %vm881, 1, 0
  %v946 = vsel %vm882, 1, 0
  %v947 = vsel %vm883, 1, 0
  %v948 = vsel %vm884, 1, 0
  %v949 = vsel %vm885, 1, 0
  %v950 = vsel %vm886, 1, 0
  %v951 = vsel %vm887, 1, 0
  %v952 = vsel %vm888, 1, 0
  %v953 = vsel %vm889, 1, 0
  %v954 = vsel %vm890, 1, 0
  %v955 = vsel %vm891, 1, 0
  %v956 = vsel %vm892, 1, 0
  %v957 = vsel %vm893, 1, 0
  %v958 = vsel %vm894, 1, 0
  %v959 = vsel %vm895, 1, 0
  %v960 = vsel %vm896, 1, 0
  %v961 = vsel %vm897, 1, 0
  %v962 = vsel %vm898, 1, 0
  %v963 = vsel %vm899, 1, 0
  %v964 = vsel %vm900, 1, 0
  %v965 = vsel %vm901, 1, 0
  %v966 = vsel %vm902, 1, 0
  %v967 = vsel %vm903, 1, 0
  %v968 = vsel %vm904, 1, 0
  %v969 = vsel %vm905, 1, 0
  %v970 = vsel %vm906, 1, 0
  %v971 = vsel %vm907, 1, 0
  %v972 = vsel %vm908, 1, 0
  %v973 = vsel %vm909, 1, 0
  %v974 = vsel %vm910, 1, 0
  %v975 = vsel %vm911, 1, 0
  %v976 = vsel %vm912, 1, 0
  %v977 = vsel %vm913, 1, 0
  %v978 = vsel %vm914, 1, 0
  %v979 = vsel %vm915, 1, 0
  %v980 = vsel %vm916, 1, 0
  %v981 = vsel %vm917, 1, 0
  %v982 = vsel %vm918, 1, 0
  %v983 = vsel %vm919, 1, 0
  %v984 = vsel %vm920, 1, 0
  %v985 = vsel %vm921, 1, 0
  %v986 = vsel %vm922, 1, 0
  %v987 = vsel %vm923, 1, 0
  %v988 = vsel %vm924, 1, 0
  %v989 = vsel %vm925, 1, 0
  %v990 = vsel %vm926, 1, 0
  %v991 = vsel %vm927, 1, 0
  %v992 = vsel %vm928, 1, 0
  %v993 = vsel %vm929, 1, 0
  %v994 = vsel %vm930, 1, 0
  %v995 = vsel %vm931, 1, 0
  %v996 = vsel %vm932, 1, 0
  %vm997 = vcmp.eq.s32.totalorder %v933, 1
  %vm998 = vcmp.eq.s32.totalorder %v934, 1
  %vm999 = vcmp.eq.s32.totalorder %v935, 1
  %vm1000 = vcmp.eq.s32.totalorder %v936, 1
  %vm1001 = vcmp.eq.s32.totalorder %v937, 1
  %vm1002 = vcmp.eq.s32.totalorder %v938, 1
  %vm1003 = vcmp.eq.s32.totalorder %v939, 1
  %vm1004 = vcmp.eq.s32.totalorder %v940, 1
  %vm1005 = vcmp.eq.s32.totalorder %v941, 1
  %vm1006 = vcmp.eq.s32.totalorder %v942, 1
  %vm1007 = vcmp.eq.s32.totalorder %v943, 1
  %vm1008 = vcmp.eq.s32.totalorder %v944, 1
  %vm1009 = vcmp.eq.s32.totalorder %v945, 1
  %vm1010 = vcmp.eq.s32.totalorder %v946, 1
  %vm1011 = vcmp.eq.s32.totalorder %v947, 1
  %vm1012 = vcmp.eq.s32.totalorder %v948, 1
  %vm1013 = vcmp.eq.s32.totalorder %v949, 1
  %vm1014 = vcmp.eq.s32.totalorder %v950, 1
  %vm1015 = vcmp.eq.s32.totalorder %v951, 1
  %vm1016 = vcmp.eq.s32.totalorder %v952, 1
  %vm1017 = vcmp.eq.s32.totalorder %v953, 1
  %vm1018 = vcmp.eq.s32.totalorder %v954, 1
  %vm1019 = vcmp.eq.s32.totalorder %v955, 1
  %vm1020 = vcmp.eq.s32.totalorder %v956, 1
  %vm1021 = vcmp.eq.s32.totalorder %v957, 1
  %vm1022 = vcmp.eq.s32.totalorder %v958, 1
  %vm1023 = vcmp.eq.s32.totalorder %v959, 1
  %vm1024 = vcmp.eq.s32.totalorder %v960, 1
  %vm1025 = vcmp.eq.s32.totalorder %v961, 1
  %vm1026 = vcmp.eq.s32.totalorder %v962, 1
  %vm1027 = vcmp.eq.s32.totalorder %v963, 1
  %vm1028 = vcmp.eq.s32.totalorder %v964, 1
  %vm1029 = vcmp.eq.s32.totalorder %v965, 1
  %vm1030 = vcmp.eq.s32.totalorder %v966, 1
  %vm1031 = vcmp.eq.s32.totalorder %v967, 1
  %vm1032 = vcmp.eq.s32.totalorder %v968, 1
  %vm1033 = vcmp.eq.s32.totalorder %v969, 1
  %vm1034 = vcmp.eq.s32.totalorder %v970, 1
  %vm1035 = vcmp.eq.s32.totalorder %v971, 1
  %vm1036 = vcmp.eq.s32.totalorder %v972, 1
  %vm1037 = vcmp.eq.s32.totalorder %v973, 1
  %vm1038 = vcmp.eq.s32.totalorder %v974, 1
  %vm1039 = vcmp.eq.s32.totalorder %v975, 1
  %vm1040 = vcmp.eq.s32.totalorder %v976, 1
  %vm1041 = vcmp.eq.s32.totalorder %v977, 1
  %vm1042 = vcmp.eq.s32.totalorder %v978, 1
  %vm1043 = vcmp.eq.s32.totalorder %v979, 1
  %vm1044 = vcmp.eq.s32.totalorder %v980, 1
  %vm1045 = vcmp.eq.s32.totalorder %v981, 1
  %vm1046 = vcmp.eq.s32.totalorder %v982, 1
  %vm1047 = vcmp.eq.s32.totalorder %v983, 1
  %vm1048 = vcmp.eq.s32.totalorder %v984, 1
  %vm1049 = vcmp.eq.s32.totalorder %v985, 1
  %vm1050 = vcmp.eq.s32.totalorder %v986, 1
  %vm1051 = vcmp.eq.s32.totalorder %v987, 1
  %vm1052 = vcmp.eq.s32.totalorder %v988, 1
  %vm1053 = vcmp.eq.s32.totalorder %v989, 1
  %vm1054 = vcmp.eq.s32.totalorder %v990, 1
  %vm1055 = vcmp.eq.s32.totalorder %v991, 1
  %vm1056 = vcmp.eq.s32.totalorder %v992, 1
  %vm1057 = vcmp.eq.s32.totalorder %v993, 1
  %vm1058 = vcmp.eq.s32.totalorder %v994, 1
  %vm1059 = vcmp.eq.s32.totalorder %v995, 1
  %vm1060 = vcmp.eq.s32.totalorder %v996, 1
  %v1061 = vsel %vm997, %v420, 0.0
  %v1062 = vsel %vm998, %v423, 0.0
  %v1063 = vsel %vm999, %v428, 0.0
  %v1064 = vsel %vm1000, %v431, 0.0
  %v1065 = vsel %vm1001, %v436, 0.0
  %v1066 = vsel %vm1002, %v439, 0.0
  %v1067 = vsel %vm1003, %v444, 0.0
  %v1068 = vsel %vm1004, %v447, 0.0
  %v1069 = vsel %vm1005, %v452, 0.0
  %v1070 = vsel %vm1006, %v455, 0.0
  %v1071 = vsel %vm1007, %v460, 0.0
  %v1072 = vsel %vm1008, %v463, 0.0
  %v1073 = vsel %vm1009, %v468, 0.0
  %v1074 = vsel %vm1010, %v471, 0.0
  %v1075 = vsel %vm1011, %v476, 0.0
  %v1076 = vsel %vm1012, %v479, 0.0
  %v1077 = vsel %vm1013, %v484, 0.0
  %v1078 = vsel %vm1014, %v487, 0.0
  %v1079 = vsel %vm1015, %v492, 0.0
  %v1080 = vsel %vm1016, %v495, 0.0
  %v1081 = vsel %vm1017, %v500, 0.0
  %v1082 = vsel %vm1018, %v503, 0.0
  %v1083 = vsel %vm1019, %v508, 0.0
  %v1084 = vsel %vm1020, %v511, 0.0
  %v1085 = vsel %vm1021, %v516, 0.0
  %v1086 = vsel %vm1022, %v519, 0.0
  %v1087 = vsel %vm1023, %v524, 0.0
  %v1088 = vsel %vm1024, %v527, 0.0
  %v1089 = vsel %vm1025, %v532, 0.0
  %v1090 = vsel %vm1026, %v535, 0.0
  %v1091 = vsel %vm1027, %v540, 0.0
  %v1092 = vsel %vm1028, %v543, 0.0
  %v1093 = vsel %vm1029, %v548, 0.0
  %v1094 = vsel %vm1030, %v551, 0.0
  %v1095 = vsel %vm1031, %v556, 0.0
  %v1096 = vsel %vm1032, %v559, 0.0
  %v1097 = vsel %vm1033, %v564, 0.0
  %v1098 = vsel %vm1034, %v567, 0.0
  %v1099 = vsel %vm1035, %v572, 0.0
  %v1100 = vsel %vm1036, %v575, 0.0
  %v1101 = vsel %vm1037, %v580, 0.0
  %v1102 = vsel %vm1038, %v583, 0.0
  %v1103 = vsel %vm1039, %v588, 0.0
  %v1104 = vsel %vm1040, %v591, 0.0
  %v1105 = vsel %vm1041, %v596, 0.0
  %v1106 = vsel %vm1042, %v599, 0.0
  %v1107 = vsel %vm1043, %v604, 0.0
  %v1108 = vsel %vm1044, %v607, 0.0
  %v1109 = vsel %vm1045, %v612, 0.0
  %v1110 = vsel %vm1046, %v615, 0.0
  %v1111 = vsel %vm1047, %v620, 0.0
  %v1112 = vsel %vm1048, %v623, 0.0
  %v1113 = vsel %vm1049, %v628, 0.0
  %v1114 = vsel %vm1050, %v631, 0.0
  %v1115 = vsel %vm1051, %v636, 0.0
  %v1116 = vsel %vm1052, %v639, 0.0
  %v1117 = vsel %vm1053, %v644, 0.0
  %v1118 = vsel %vm1054, %v647, 0.0
  %v1119 = vsel %vm1055, %v652, 0.0
  %v1120 = vsel %vm1056, %v655, 0.0
  %v1121 = vsel %vm1057, %v660, 0.0
  %v1122 = vsel %vm1058, %v663, 0.0
  %v1123 = vsel %vm1059, %v668, 0.0
  %v1124 = vsel %vm1060, %v671, 0.0
  %v1125 = vadd.f32 %v1061, %v1062
  %v1126 = vadd.f32 %v1125, %v1063
  %v1127 = vadd.f32 %v1126, %v1064
  %v1128 = vadd.f32 %v1127, %v1065
  %v1129 = vadd.f32 %v1128, %v1066
  %v1130 = vadd.f32 %v1129, %v1067
  %v1131 = vadd.f32 %v1130, %v1068
  %v1132 = vadd.f32 %v1131, %v1069
  %v1133 = vadd.f32 %v1132, %v1070
  %v1134 = vadd.f32 %v1133, %v1071
  %v1135 = vadd.f32 %v1134, %v1072
  %v1136 = vadd.f32 %v1135, %v1073
  %v1137 = vadd.f32 %v1136, %v1074
  %v1138 = vadd.f32 %v1137, %v1075
  %v1139 = vadd.f32 %v1138, %v1076
  %v1140 = vadd.f32 %v1139, %v1077
  %v1141 = vadd.f32 %v1140, %v1078
  %v1142 = vadd.f32 %v1141, %v1079
  %v1143 = vadd.f32 %v1142, %v1080
  %v1144 = vadd.f32 %v1143, %v1081
  %v1145 = vadd.f32 %v1144, %v1082
  %v1146 = vadd.f32 %v1145, %v1083
  %v1147 = vadd.f32 %v1146, %v1084
  %v1148 = vadd.f32 %v1147, %v1085
  %v1149 = vadd.f32 %v1148, %v1086
  %v1150 = vadd.f32 %v1149, %v1087
  %v1151 = vadd.f32 %v1150, %v1088
  %v1152 = vadd.f32 %v1151, %v1089
  %v1153 = vadd.f32 %v1152, %v1090
  %v1154 = vadd.f32 %v1153, %v1091
  %v1155 = vadd.f32 %v1154, %v1092
  %v1156 = vadd.f32 %v1155, %v1093
  %v1157 = vadd.f32 %v1156, %v1094
  %v1158 = vadd.f32 %v1157, %v1095
  %v1159 = vadd.f32 %v1158, %v1096
  %v1160 = vadd.f32 %v1159, %v1097
  %v1161 = vadd.f32 %v1160, %v1098
  %v1162 = vadd.f32 %v1161, %v1099
  %v1163 = vadd.f32 %v1162, %v1100
  %v1164 = vadd.f32 %v1163, %v1101
  %v1165 = vadd.f32 %v1164, %v1102
  %v1166 = vadd.f32 %v1165, %v1103
  %v1167 = vadd.f32 %v1166, %v1104
  %v1168 = vadd.f32 %v1167, %v1105
  %v1169 = vadd.f32 %v1168, %v1106
  %v1170 = vadd.f32 %v1169, %v1107
  %v1171 = vadd.f32 %v1170, %v1108
  %v1172 = vadd.f32 %v1171, %v1109
  %v1173 = vadd.f32 %v1172, %v1110
  %v1174 = vadd.f32 %v1173, %v1111
  %v1175 = vadd.f32 %v1174, %v1112
  %v1176 = vadd.f32 %v1175, %v1113
  %v1177 = vadd.f32 %v1176, %v1114
  %v1178 = vadd.f32 %v1177, %v1115
  %v1179 = vadd.f32 %v1178, %v1116
  %v1180 = vadd.f32 %v1179, %v1117
  %v1181 = vadd.f32 %v1180, %v1118
  %v1182 = vadd.f32 %v1181, %v1119
  %v1183 = vadd.f32 %v1182, %v1120
  %v1184 = vadd.f32 %v1183, %v1121
  %v1185 = vadd.f32 %v1184, %v1122
  %v1186 = vadd.f32 %v1185, %v1123
  %v1187 = vadd.f32 %v1186, %v1124
  %v1188 = vrot.slane %v1187, 4
  %v1189 = vadd.f32 %v1187, %v1188
  %v1190 = vrot.slane %v1189, 2
  %v1191 = vadd.f32 %v1189, %v1190
  %v1192 = vrot.slane %v1191, 1
  %v1193 = vadd.f32 %v1191, %v1192
  %v1194 = vmul.f32 %v1061, %v1061
  %v1195 = vmul.f32 %v1062, %v1062
  %v1196 = vmul.f32 %v1063, %v1063
  %v1197 = vmul.f32 %v1064, %v1064
  %v1198 = vmul.f32 %v1065, %v1065
  %v1199 = vmul.f32 %v1066, %v1066
  %v1200 = vmul.f32 %v1067, %v1067
  %v1201 = vmul.f32 %v1068, %v1068
  %v1202 = vmul.f32 %v1069, %v1069
  %v1203 = vmul.f32 %v1070, %v1070
  %v1204 = vmul.f32 %v1071, %v1071
  %v1205 = vmul.f32 %v1072, %v1072
  %v1206 = vmul.f32 %v1073, %v1073
  %v1207 = vmul.f32 %v1074, %v1074
  %v1208 = vmul.f32 %v1075, %v1075
  %v1209 = vmul.f32 %v1076, %v1076
  %v1210 = vmul.f32 %v1077, %v1077
  %v1211 = vmul.f32 %v1078, %v1078
  %v1212 = vmul.f32 %v1079, %v1079
  %v1213 = vmul.f32 %v1080, %v1080
  %v1214 = vmul.f32 %v1081, %v1081
  %v1215 = vmul.f32 %v1082, %v1082
  %v1216 = vmul.f32 %v1083, %v1083
  %v1217 = vmul.f32 %v1084, %v1084
  %v1218 = vmul.f32 %v1085, %v1085
  %v1219 = vmul.f32 %v1086, %v1086
  %v1220 = vmul.f32 %v1087, %v1087
  %v1221 = vmul.f32 %v1088, %v1088
  %v1222 = vmul.f32 %v1089, %v1089
  %v1223 = vmul.f32 %v1090, %v1090
  %v1224 = vmul.f32 %v1091, %v1091
  %v1225 = vmul.f32 %v1092, %v1092
  %v1226 = vmul.f32 %v1093, %v1093
  %v1227 = vmul.f32 %v1094, %v1094
  %v1228 = vmul.f32 %v1095, %v1095
  %v1229 = vmul.f32 %v1096, %v1096
  %v1230 = vmul.f32 %v1097, %v1097
  %v1231 = vmul.f32 %v1098, %v1098
  %v1232 = vmul.f32 %v1099, %v1099
  %v1233 = vmul.f32 %v1100, %v1100
  %v1234 = vmul.f32 %v1101, %v1101
  %v1235 = vmul.f32 %v1102, %v1102
  %v1236 = vmul.f32 %v1103, %v1103
  %v1237 = vmul.f32 %v1104, %v1104
  %v1238 = vmul.f32 %v1105, %v1105
  %v1239 = vmul.f32 %v1106, %v1106
  %v1240 = vmul.f32 %v1107, %v1107
  %v1241 = vmul.f32 %v1108, %v1108
  %v1242 = vmul.f32 %v1109, %v1109
  %v1243 = vmul.f32 %v1110, %v1110
  %v1244 = vmul.f32 %v1111, %v1111
  %v1245 = vmul.f32 %v1112, %v1112
  %v1246 = vmul.f32 %v1113, %v1113
  %v1247 = vmul.f32 %v1114, %v1114
  %v1248 = vmul.f32 %v1115, %v1115
  %v1249 = vmul.f32 %v1116, %v1116
  %v1250 = vmul.f32 %v1117, %v1117
  %v1251 = vmul.f32 %v1118, %v1118
  %v1252 = vmul.f32 %v1119, %v1119
  %v1253 = vmul.f32 %v1120, %v1120
  %v1254 = vmul.f32 %v1121, %v1121
  %v1255 = vmul.f32 %v1122, %v1122
  %v1256 = vmul.f32 %v1123, %v1123
  %v1257 = vmul.f32 %v1124, %v1124
  %v1258 = vadd.f32 %v1194, %v1195
  %v1259 = vadd.f32 %v1258, %v1196
  %v1260 = vadd.f32 %v1259, %v1197
  %v1261 = vadd.f32 %v1260, %v1198
  %v1262 = vadd.f32 %v1261, %v1199
  %v1263 = vadd.f32 %v1262, %v1200
  %v1264 = vadd.f32 %v1263, %v1201
  %v1265 = vadd.f32 %v1264, %v1202
  %v1266 = vadd.f32 %v1265, %v1203
  %v1267 = vadd.f32 %v1266, %v1204
  %v1268 = vadd.f32 %v1267, %v1205
  %v1269 = vadd.f32 %v1268, %v1206
  %v1270 = vadd.f32 %v1269, %v1207
  %v1271 = vadd.f32 %v1270, %v1208
  %v1272 = vadd.f32 %v1271, %v1209
  %v1273 = vadd.f32 %v1272, %v1210
  %v1274 = vadd.f32 %v1273, %v1211
  %v1275 = vadd.f32 %v1274, %v1212
  %v1276 = vadd.f32 %v1275, %v1213
  %v1277 = vadd.f32 %v1276, %v1214
  %v1278 = vadd.f32 %v1277, %v1215
  %v1279 = vadd.f32 %v1278, %v1216
  %v1280 = vadd.f32 %v1279, %v1217
  %v1281 = vadd.f32 %v1280, %v1218
  %v1282 = vadd.f32 %v1281, %v1219
  %v1283 = vadd.f32 %v1282, %v1220
  %v1284 = vadd.f32 %v1283, %v1221
  %v1285 = vadd.f32 %v1284, %v1222
  %v1286 = vadd.f32 %v1285, %v1223
  %v1287 = vadd.f32 %v1286, %v1224
  %v1288 = vadd.f32 %v1287, %v1225
  %v1289 = vadd.f32 %v1288, %v1226
  %v1290 = vadd.f32 %v1289, %v1227
  %v1291 = vadd.f32 %v1290, %v1228
  %v1292 = vadd.f32 %v1291, %v1229
  %v1293 = vadd.f32 %v1292, %v1230
  %v1294 = vadd.f32 %v1293, %v1231
  %v1295 = vadd.f32 %v1294, %v1232
  %v1296 = vadd.f32 %v1295, %v1233
  %v1297 = vadd.f32 %v1296, %v1234
  %v1298 = vadd.f32 %v1297, %v1235
  %v1299 = vadd.f32 %v1298, %v1236
  %v1300 = vadd.f32 %v1299, %v1237
  %v1301 = vadd.f32 %v1300, %v1238
  %v1302 = vadd.f32 %v1301, %v1239
  %v1303 = vadd.f32 %v1302, %v1240
  %v1304 = vadd.f32 %v1303, %v1241
  %v1305 = vadd.f32 %v1304, %v1242
  %v1306 = vadd.f32 %v1305, %v1243
  %v1307 = vadd.f32 %v1306, %v1244
  %v1308 = vadd.f32 %v1307, %v1245
  %v1309 = vadd.f32 %v1308, %v1246
  %v1310 = vadd.f32 %v1309, %v1247
  %v1311 = vadd.f32 %v1310, %v1248
  %v1312 = vadd.f32 %v1311, %v1249
  %v1313 = vadd.f32 %v1312, %v1250
  %v1314 = vadd.f32 %v1313, %v1251
  %v1315 = vadd.f32 %v1314, %v1252
  %v1316 = vadd.f32 %v1315, %v1253
  %v1317 = vadd.f32 %v1316, %v1254
  %v1318 = vadd.f32 %v1317, %v1255
  %v1319 = vadd.f32 %v1318, %v1256
  %v1320 = vadd.f32 %v1319, %v1257
  %v1321 = vrot.slane %v1320, 4
  %v1322 = vadd.f32 %v1320, %v1321
  %v1323 = vrot.slane %v1322, 2
  %v1324 = vadd.f32 %v1322, %v1323
  %v1325 = vrot.slane %v1324, 1
  %v1326 = vadd.f32 %v1324, %v1325
  %vm1327 = vcmask 1040384
  %v1328 = vsel %vm1327, %v1193, %v1326
  %1329 = vst [vmem:[%s4] sm:$0x3] %v1328
  // Predicated region
  $region14: #{upstream_block_2d_forward.6} parent=0 // pred_check
    _
  $region15: #{upstream_block_2d_forward.6} parent=0 // pred_check_branch
    %1331 = sbr.rel (0) target = $region17
  $region16: #{upstream_block_2d_forward.6} parent=0 // pred_region
    _
  $region17: #{upstream_block_2d_forward.6} parent=0 // pred_fallthru
    _
  // Predicated region
  $region18: #{upstream_block_2d_forward.6} parent=0 // pred_check
    _
  $region19: #{upstream_block_2d_forward.6} parent=0 // pred_check_branch
    %1333 = sbr.rel (0) target = $region21
  $region20: #{upstream_block_2d_forward.6} parent=0 // pred_region
    _
  $region21: #{upstream_block_2d_forward.6} parent=0 // pred_fallthru
    _
  // Predicated region
  $region22: #{upstream_block_2d_forward.6} parent=0 // pred_check
    _
  $region23: #{upstream_block_2d_forward.6} parent=0 // pred_check_branch
    %1335 = sbr.rel (0) target = $region25
  $region24: #{upstream_block_2d_forward.6} parent=0 // pred_region
    _
  $region25: #{upstream_block_2d_forward.6} parent=0 // pred_fallthru
    _
  // Predicated region
  $region26: #{upstream_block_2d_forward.6} parent=0 // pred_check
    _
  $region27: #{upstream_block_2d_forward.6} parent=0 // pred_check_branch
    %1337 = sbr.rel (0) target = $region29
  $region28: #{upstream_block_2d_forward.6} parent=0 // pred_region
    _
  $region29: #{upstream_block_2d_forward.6} parent=0 // pred_fallthru
    _

</llo_original>
